<compile_context>
chip_gen: v5e
topology: v5e:2x2
jax: 0.10.0
libtpu: 0.0.40
codegen_flags: <defaults>
</compile_context>

<pallas_src>
import jax
import jax.numpy as jnp
from jax.experimental import pallas as pl
from jax.experimental.pallas import tpu as pltpu


# ----------------------------------------------------------------------------
# in-kernel building blocks
# ----------------------------------------------------------------------------
def _channel_attention(x, w1t, w2t):
    """x: (Bt, C, HW) f32; w1t: (C, Ch_pad); w2t: (Ch_pad, C) -> (Bt, C, 1) gate."""
    bt = x.shape[0]
    avg = jnp.mean(x, axis=2)                         # AdaptiveAvgPool2d(1) -> (Bt, C)
    mx = jnp.max(x, axis=2)                           # AdaptiveMaxPool2d(1) -> (Bt, C)
    pooled = jnp.concatenate([avg, mx], axis=0)       # (2*Bt, C): one fused MLP rhs
    h = jnp.maximum(
        jnp.dot(pooled, w1t, preferred_element_type=jnp.float32), 0.0)   # (2*Bt, Ch_pad)
    o = jnp.dot(h, w2t, preferred_element_type=jnp.float32)              # (2*Bt, C)
    att = jax.nn.sigmoid(o[:bt] + o[bt:])             # (Bt, C)
    return att[:, :, None]                            # (Bt, C, 1)


def _spatial_attention(x, k_mat):
    """x: (Bt, C, HW) f32; k_mat: (2*HW, HW) f32 (7x7 conv + zero-padding baked in).

    Returns (Bt, 1, HW) gate.  The whole spatial conv is one MXU matmul."""
    avg = jnp.mean(x, axis=1)                         # channel mean -> (Bt, HW)
    mx = jnp.max(x, axis=1)                           # channel max  -> (Bt, HW)
    maps = jnp.concatenate([avg, mx], axis=1)         # (Bt, 2*HW)
    acc = jnp.dot(maps, k_mat, preferred_element_type=jnp.float32)   # (Bt, HW)
    return jax.nn.sigmoid(acc)[:, None, :]            # (Bt, 1, HW)


def dcbam_kernel(x_ref, ca1_w1t_ref, ca1_w2t_ref, ca2_w1t_ref, ca2_w2t_ref,
                 sa1_k_ref, sa2_k_ref, o_ref):
    x = x_ref[...].astype(jnp.float32)                # (Bt, C, HW)

    ca1 = _channel_attention(x, ca1_w1t_ref[...], ca1_w2t_ref[...])   # (Bt, C, 1)
    sa1 = _spatial_attention(x, sa1_k_ref[...])                       # (Bt, 1, HW)
    xc = (ca1 + sa1) * x                              # == ca1*x + sa1*x (f1 + f2)

    sa2 = _spatial_attention(xc, sa2_k_ref[...])
    d1 = sa2 * xc
    ca2 = _channel_attention(d1, ca2_w1t_ref[...], ca2_w2t_ref[...])
    o_ref[...] = (ca2 * d1).astype(o_ref.dtype)


# ----------------------------------------------------------------------------
# wrapper-side precompute
# ----------------------------------------------------------------------------
def _spatial_conv_matrix(w_flat, H, W):
    """Bake a 7x7, stride-1, pad-3, bias-free conv over [avg;max] maps into a
    (2*HW, HW) matrix K so that out[b, p] = sum_j concat([avg,max])[b, j] * K[j, p].

    Zero padding is encoded by simply dropping out-of-bounds taps."""
    HW = H * W
    w = w_flat.reshape(2, 7, 7).astype(jnp.float32)
    pix = jnp.arange(HW, dtype=jnp.int32)
    ph, pw = pix // W, pix % W
    off = jnp.arange(7, dtype=jnp.int32) - 3
    sh = ph[:, None, None] + off[None, :, None]              # (HW, 7, 1)
    sw = pw[:, None, None] + off[None, None, :]              # (HW, 1, 7)
    valid = (sh >= 0) & (sh < H) & (sw >= 0) & (sw < W)      # (HW, 7, 7)
    src = jnp.where(valid, sh * W + sw, 0)                   # (HW, 7, 7) source pixel
    dst = jnp.broadcast_to(pix[:, None, None], (HW, 7, 7))   # (HW, 7, 7) output pixel
    k = jnp.zeros((2, HW, HW), jnp.float32)
    for c in range(2):                                       # c: 0=avg map, 1=max map
        vals = jnp.where(valid, w[c][None, :, :], 0.0)       # (HW, 7, 7)
        k = k.at[c, src.ravel(), dst.ravel()].add(vals.ravel())
    return k.reshape(2 * HW, HW)


def _per_image_bytes(C, HW, itemsize):
    # double-buffered in+out blocks (2 + 2 copies in I/O dtype) + ~4 live f32 temps
    return C * HW * (4 * itemsize + 4 * 4)


def _pick_b_tile(B, C, HW, itemsize):
    """Largest batch tile that fits a conservative VMEM budget.  No forced
    splitting on single-TC chips (v5e/v6e); split for v7x megacore only when
    each grid step stays large enough to amortize per-step pipeline overhead."""
    per_img = _per_image_bytes(C, HW, itemsize)
    budget = 20 << 20                                  # conservative across v5e/v6e/v7x
    bt = max(1, min(B, budget // max(1, per_img)))
    while B % bt:
        bt -= 1
    if bt == B and B >= 2 and (B // 2) * per_img >= (4 << 20):
        bt = B // 2
        while B % bt:
            bt -= 1
    return bt


def _vmem_limit_bytes(bt, C, HW, itemsize):
    consts = 2 * (2 * HW) * HW * 4 + (64 << 10)        # SA conv matrices + CA weights
    need = bt * _per_image_bytes(C, HW, itemsize) + consts + (2 << 20)
    # >= 32 MiB works on all generations; cap at 48 MiB (v7x physical is 64 MiB/TC).
    return int(min(48 << 20, max(32 << 20, need)))


def dcbam_forward(x, params, *, b_tile=None):
    ca1_w1, ca1_w2, ca2_w1, ca2_w2, sa1_w, sa2_w = params
    B, C, H, W = x.shape
    HW = H * W
    Ch = ca1_w1.shape[0]
    ch_pad = max(8, ((Ch + 7) // 8) * 8)               # sublane-aligned hidden dim

    # TODO(synk): for very large feature maps (HW >> a few K) the (2*HW, HW) conv
    # matrix becomes impractical; fall back to a roll-based tap loop with
    # premultiplied mask*weight maps instead of building K.
    assert 2 * HW * HW * 4 <= (16 << 20), "spatial-conv-as-matmul needs modest HW"

    if b_tile is None:
        b_tile = _pick_b_tile(B, C, HW, x.dtype.itemsize)
    assert B % b_tile == 0
    vmem_limit = _vmem_limit_bytes(b_tile, C, HW, x.dtype.itemsize)

    x2 = x.reshape(B, C, HW)                           # lane-dense: H*W on lane axis

    # CA MLP weights: transpose for right-multiplication and zero-pad hidden dim
    # to a sublane multiple (exact no-op through ReLU / second matmul).
    def prep_w1t(w1):                                  # (Ch, C) -> (C, ch_pad)
        return jnp.pad(w1.T.astype(jnp.float32), ((0, 0), (0, ch_pad - Ch)))

    def prep_w2t(w2):                                  # (C, Ch) -> (ch_pad, C)
        return jnp.pad(w2.T.astype(jnp.float32), ((0, ch_pad - Ch), (0, 0)))

    sa1_k = _spatial_conv_matrix(sa1_w, H, W)          # (2*HW, HW)
    sa2_k = _spatial_conv_matrix(sa2_w, H, W)

    img_spec = pl.BlockSpec((b_tile, C, HW), lambda b: (b, 0, 0))
    w1t_spec = pl.BlockSpec((C, ch_pad), lambda b: (0, 0))
    w2t_spec = pl.BlockSpec((ch_pad, C), lambda b: (0, 0))
    k_spec = pl.BlockSpec((2 * HW, HW), lambda b: (0, 0))

    out = pl.pallas_call(
        dcbam_kernel,
        out_shape=jax.ShapeDtypeStruct((B, C, HW), x.dtype),
        grid=(B // b_tile,),
        in_specs=[img_spec, w1t_spec, w2t_spec, w1t_spec, w2t_spec,
                  k_spec, k_spec],
        out_specs=img_spec,
        compiler_params=pltpu.CompilerParams(
            dimension_semantics=("parallel",),
            vmem_limit_bytes=vmem_limit),
    )(x2, prep_w1t(ca1_w1), prep_w2t(ca1_w2), prep_w1t(ca2_w1), prep_w2t(ca2_w2),
      sa1_k, sa2_k)
    return out.reshape(B, C, H, W)


# ----------------------------------------------------------------------------
# pure-JAX reference (for correctness check)
# ----------------------------------------------------------------------------
def dcbam_reference(x, params):
    ca1_w1, ca1_w2, ca2_w1, ca2_w2, sa1_w, sa2_w = params
    x = x.astype(jnp.float32)

    def channel_att(t, w1, w2):
        avg = jnp.mean(t, axis=(2, 3))          # (B, C)
        mx = jnp.max(t, axis=(2, 3))            # (B, C)

        def mlp(v):
            return jnp.maximum(v @ w1.T, 0.0) @ w2.T

        return jax.nn.sigmoid(mlp(avg) + mlp(mx))[:, :, None, None]

    def spatial_att(t, w_flat):
        w = w_flat.reshape(2, 7, 7)
        B, C, H, W = t.shape
        avg = jnp.mean(t, axis=1)
        mx = jnp.max(t, axis=1)
        maps = jnp.stack([avg, mx], axis=1)     # (B, 2, H, W)
        p = jnp.pad(maps, ((0, 0), (0, 0), (3, 3), (3, 3)))
        acc = jnp.zeros((B, H, W), jnp.float32)
        for c in range(2):
            for ky in range(7):
                for kx in range(7):
                    acc = acc + p[:, c, ky:ky + H, kx:kx + W] * w[c, ky, kx]
        return jax.nn.sigmoid(acc)[:, None, :, :]

    f1 = channel_att(x, ca1_w1, ca1_w2) * x
    f2 = spatial_att(x, sa1_w) * x
    xc = f1 + f2
    d1 = spatial_att(xc, sa2_w) * xc
    d2 = channel_att(d1, ca2_w1, ca2_w2) * d1
    return d2


# ----------------------------------------------------------------------------
if __name__ == "__main__":
    # small shapes consistent with the module: N=2, C=32, H=W=16, ratio=8 -> hidden=4
    B, C, H, W = 2, 32, 16, 16
    ratio = 8
    Ch = C // ratio

    key = jax.random.PRNGKey(0)
    kx, k1, k2, k3, k4, k5, k6 = jax.random.split(key, 7)
    x = jax.random.normal(kx, (B, C, H, W), jnp.float32)

    s_ca1 = 1.0 / jnp.sqrt(jnp.float32(C))
    s_ca2 = 1.0 / jnp.sqrt(jnp.float32(Ch))
    s_sa = 1.0 / jnp.sqrt(jnp.float32(2 * 7 * 7))
    params = (
        jax.random.normal(k1, (Ch, C), jnp.float32) * s_ca1,       # CA1 conv1 weight (hidden, C)
        jax.random.normal(k2, (C, Ch), jnp.float32) * s_ca2,       # CA1 conv2 weight (C, hidden)
        jax.random.normal(k3, (Ch, C), jnp.float32) * s_ca1,       # CA2 conv1 weight
        jax.random.normal(k4, (C, Ch), jnp.float32) * s_ca2,       # CA2 conv2 weight
        jax.random.normal(k5, (2 * 7 * 7,), jnp.float32) * s_sa,   # SA1 7x7 conv weight, flat [c,ky,kx]
        jax.random.normal(k6, (2 * 7 * 7,), jnp.float32) * s_sa,   # SA2 7x7 conv weight, flat [c,ky,kx]
    )

    fwd = jax.jit(dcbam_forward)
    out = jax.block_until_ready(fwd(x, params))
    ref = jax.block_until_ready(dcbam_reference(x, params))

    assert out.shape == x.shape and out.dtype == x.dtype
    max_err = float(jnp.max(jnp.abs(out - ref)))
    assert jnp.allclose(out, ref, atol=2e-3, rtol=2e-3), f"max abs err {max_err}"
    print("KERNEL_OK")
</pallas_src>

<mosaic_0001>
module attributes {stable_mosaic.version = 11 : i64} {
  func.func @dcbam_kernel(%arg0: i32, %arg1: memref<2x32x256xf32, #tpu.memory_space<vmem>>, %arg2: memref<32x8xf32, #tpu.memory_space<vmem>>, %arg3: memref<8x32xf32, #tpu.memory_space<vmem>>, %arg4: memref<32x8xf32, #tpu.memory_space<vmem>>, %arg5: memref<8x32xf32, #tpu.memory_space<vmem>>, %arg6: memref<512x256xf32, #tpu.memory_space<vmem>>, %arg7: memref<512x256xf32, #tpu.memory_space<vmem>>, %arg8: memref<2x32x256xf32, #tpu.memory_space<vmem>>) attributes {dimension_semantics = [#tpu.dimension_semantics<parallel>], iteration_bounds = array<i64: 1>, scalar_prefetch = 0 : i64, scratch_operands = 0 : i64, tpu.core_type = #tpu.core_type<tc>, window_params = [{transform_indices = @transform_0, window_bounds = array<i64: 2, 32, 256>}, {pipeline_mode = #tpu.pipeline_mode<synchronous>, transform_indices = @transform_1, window_bounds = array<i64: 32, 8>}, {pipeline_mode = #tpu.pipeline_mode<synchronous>, transform_indices = @transform_2, window_bounds = array<i64: 8, 32>}, {pipeline_mode = #tpu.pipeline_mode<synchronous>, transform_indices = @transform_3, window_bounds = array<i64: 32, 8>}, {pipeline_mode = #tpu.pipeline_mode<synchronous>, transform_indices = @transform_4, window_bounds = array<i64: 8, 32>}, {pipeline_mode = #tpu.pipeline_mode<synchronous>, transform_indices = @transform_5, window_bounds = array<i64: 512, 256>}, {pipeline_mode = #tpu.pipeline_mode<synchronous>, transform_indices = @transform_6, window_bounds = array<i64: 512, 256>}, {transform_indices = @transform_7, window_bounds = array<i64: 2, 32, 256>}]} {
    %c0 = arith.constant 0 : index
    %c0_0 = arith.constant 0 : index
    %c0_1 = arith.constant 0 : index
    %0 = vector.load %arg1[%c0, %c0_0, %c0_1] : memref<2x32x256xf32, #tpu.memory_space<vmem>>, vector<2x32x256xf32>
    %c0_2 = arith.constant 0 : index
    %c0_3 = arith.constant 0 : index
    %1 = vector.load %arg2[%c0_2, %c0_3] : memref<32x8xf32, #tpu.memory_space<vmem>>, vector<32x8xf32>
    %c0_4 = arith.constant 0 : index
    %c0_5 = arith.constant 0 : index
    %2 = vector.load %arg3[%c0_4, %c0_5] : memref<8x32xf32, #tpu.memory_space<vmem>>, vector<8x32xf32>
    %cst = arith.constant dense<0.000000e+00> : vector<2x32xf32>
    %3 = vector.multi_reduction <add>, %0, %cst [2] : vector<2x32x256xf32> to vector<2x32xf32>
    %cst_6 = arith.constant 2.560000e+02 : f32
    %4 = vector.broadcast %cst_6 : f32 to vector<2x32xf32>
    %5 = arith.divf %3, %4 : vector<2x32xf32>
    %cst_7 = arith.constant dense<0xFF800000> : vector<2x32xf32>
    %6 = vector.multi_reduction <maximumf>, %0, %cst_7 [2] : vector<2x32x256xf32> to vector<2x32xf32>
    %7 = tpu.concatenate %5, %6 in 0 : vector<2x32xf32>, vector<2x32xf32> -> vector<4x32xf32>
    %cst_8 = arith.constant dense<0.000000e+00> : vector<4x8xf32>
    %8 = tpu.matmul %7, %1, %cst_8 {dimension_numbers = #tpu.dot_dimension_numbers<[1], [0], [0], [1], [0, 0, 1, 1], [], []>} : vector<4x32xf32>, vector<32x8xf32>, vector<4x8xf32> -> vector<4x8xf32>
    %cst_9 = arith.constant 0.000000e+00 : f32
    %9 = vector.broadcast %cst_9 : f32 to vector<4x8xf32>
    %10 = arith.maximumf %8, %9 : vector<4x8xf32>
    %cst_10 = arith.constant dense<0.000000e+00> : vector<4x32xf32>
    %11 = tpu.matmul %10, %2, %cst_10 {dimension_numbers = #tpu.dot_dimension_numbers<[1], [0], [0], [1], [0, 0, 1, 1], [], []>} : vector<4x8xf32>, vector<8x32xf32>, vector<4x32xf32> -> vector<4x32xf32>
    %12 = vector.extract_strided_slice %11 {offsets = [0, 0], sizes = [2, 32], strides = [1, 1]} : vector<4x32xf32> to vector<2x32xf32>
    %13 = vector.extract_strided_slice %11 {offsets = [2, 0], sizes = [2, 32], strides = [1, 1]} : vector<4x32xf32> to vector<2x32xf32>
    %14 = arith.addf %12, %13 : vector<2x32xf32>
    %15 = arith.negf %14 : vector<2x32xf32>
    %16 = math.exp %15 : vector<2x32xf32>
    %cst_11 = arith.constant 1.000000e+00 : f32
    %17 = vector.broadcast %cst_11 : f32 to vector<2x32xf32>
    %18 = arith.addf %17, %16 : vector<2x32xf32>
    %19 = arith.divf %17, %18 : vector<2x32xf32>
    %20 = vector.shape_cast %19 : vector<2x32xf32> to vector<2x32x1xf32>
    %c0_12 = arith.constant 0 : index
    %c0_13 = arith.constant 0 : index
    %21 = vector.load %arg6[%c0_12, %c0_13] : memref<512x256xf32, #tpu.memory_space<vmem>>, vector<512x256xf32>
    %cst_14 = arith.constant dense<0.000000e+00> : vector<2x256xf32>
    %22 = vector.multi_reduction <add>, %0, %cst_14 [1] : vector<2x32x256xf32> to vector<2x256xf32>
    %cst_15 = arith.constant 3.200000e+01 : f32
    %23 = vector.broadcast %cst_15 : f32 to vector<2x256xf32>
    %24 = arith.divf %22, %23 : vector<2x256xf32>
    %cst_16 = arith.constant dense<0xFF800000> : vector<2x256xf32>
    %25 = vector.multi_reduction <maximumf>, %0, %cst_16 [1] : vector<2x32x256xf32> to vector<2x256xf32>
    %26 = tpu.concatenate %24, %25 in 1 : vector<2x256xf32>, vector<2x256xf32> -> vector<2x512xf32>
    %cst_17 = arith.constant dense<0.000000e+00> : vector<2x256xf32>
    %27 = tpu.matmul %26, %21, %cst_17 {dimension_numbers = #tpu.dot_dimension_numbers<[1], [0], [0], [1], [0, 0, 1, 1], [], []>} : vector<2x512xf32>, vector<512x256xf32>, vector<2x256xf32> -> vector<2x256xf32>
    %28 = arith.negf %27 : vector<2x256xf32>
    %29 = math.exp %28 : vector<2x256xf32>
    %cst_18 = arith.constant 1.000000e+00 : f32
    %30 = vector.broadcast %cst_18 : f32 to vector<2x256xf32>
    %31 = arith.addf %30, %29 : vector<2x256xf32>
    %32 = arith.divf %30, %31 : vector<2x256xf32>
    %33 = vector.shape_cast %32 : vector<2x256xf32> to vector<2x1x256xf32>
    %34 = vector.broadcast %20 : vector<2x32x1xf32> to vector<2x32x256xf32>
    %35 = vector.broadcast %33 : vector<2x1x256xf32> to vector<2x32x256xf32>
    %36 = arith.addf %34, %35 : vector<2x32x256xf32>
    %37 = arith.mulf %36, %0 : vector<2x32x256xf32>
    %c0_19 = arith.constant 0 : index
    %c0_20 = arith.constant 0 : index
    %38 = vector.load %arg7[%c0_19, %c0_20] : memref<512x256xf32, #tpu.memory_space<vmem>>, vector<512x256xf32>
    %cst_21 = arith.constant dense<0.000000e+00> : vector<2x256xf32>
    %39 = vector.multi_reduction <add>, %37, %cst_21 [1] : vector<2x32x256xf32> to vector<2x256xf32>
    %cst_22 = arith.constant 3.200000e+01 : f32
    %40 = vector.broadcast %cst_22 : f32 to vector<2x256xf32>
    %41 = arith.divf %39, %40 : vector<2x256xf32>
    %cst_23 = arith.constant dense<0xFF800000> : vector<2x256xf32>
    %42 = vector.multi_reduction <maximumf>, %37, %cst_23 [1] : vector<2x32x256xf32> to vector<2x256xf32>
    %43 = tpu.concatenate %41, %42 in 1 : vector<2x256xf32>, vector<2x256xf32> -> vector<2x512xf32>
    %cst_24 = arith.constant dense<0.000000e+00> : vector<2x256xf32>
    %44 = tpu.matmul %43, %38, %cst_24 {dimension_numbers = #tpu.dot_dimension_numbers<[1], [0], [0], [1], [0, 0, 1, 1], [], []>} : vector<2x512xf32>, vector<512x256xf32>, vector<2x256xf32> -> vector<2x256xf32>
    %45 = arith.negf %44 : vector<2x256xf32>
    %46 = math.exp %45 : vector<2x256xf32>
    %cst_25 = arith.constant 1.000000e+00 : f32
    %47 = vector.broadcast %cst_25 : f32 to vector<2x256xf32>
    %48 = arith.addf %47, %46 : vector<2x256xf32>
    %49 = arith.divf %47, %48 : vector<2x256xf32>
    %50 = vector.shape_cast %49 : vector<2x256xf32> to vector<2x1x256xf32>
    %51 = vector.broadcast %50 : vector<2x1x256xf32> to vector<2x32x256xf32>
    %52 = arith.mulf %51, %37 : vector<2x32x256xf32>
    %c0_26 = arith.constant 0 : index
    %c0_27 = arith.constant 0 : index
    %53 = vector.load %arg4[%c0_26, %c0_27] : memref<32x8xf32, #tpu.memory_space<vmem>>, vector<32x8xf32>
    %c0_28 = arith.constant 0 : index
    %c0_29 = arith.constant 0 : index
    %54 = vector.load %arg5[%c0_28, %c0_29] : memref<8x32xf32, #tpu.memory_space<vmem>>, vector<8x32xf32>
    %cst_30 = arith.constant dense<0.000000e+00> : vector<2x32xf32>
    %55 = vector.multi_reduction <add>, %52, %cst_30 [2] : vector<2x32x256xf32> to vector<2x32xf32>
    %cst_31 = arith.constant 2.560000e+02 : f32
    %56 = vector.broadcast %cst_31 : f32 to vector<2x32xf32>
    %57 = arith.divf %55, %56 : vector<2x32xf32>
    %cst_32 = arith.constant dense<0xFF800000> : vector<2x32xf32>
    %58 = vector.multi_reduction <maximumf>, %52, %cst_32 [2] : vector<2x32x256xf32> to vector<2x32xf32>
    %59 = tpu.concatenate %57, %58 in 0 : vector<2x32xf32>, vector<2x32xf32> -> vector<4x32xf32>
    %cst_33 = arith.constant dense<0.000000e+00> : vector<4x8xf32>
    %60 = tpu.matmul %59, %53, %cst_33 {dimension_numbers = #tpu.dot_dimension_numbers<[1], [0], [0], [1], [0, 0, 1, 1], [], []>} : vector<4x32xf32>, vector<32x8xf32>, vector<4x8xf32> -> vector<4x8xf32>
    %cst_34 = arith.constant 0.000000e+00 : f32
    %61 = vector.broadcast %cst_34 : f32 to vector<4x8xf32>
    %62 = arith.maximumf %60, %61 : vector<4x8xf32>
    %cst_35 = arith.constant dense<0.000000e+00> : vector<4x32xf32>
    %63 = tpu.matmul %62, %54, %cst_35 {dimension_numbers = #tpu.dot_dimension_numbers<[1], [0], [0], [1], [0, 0, 1, 1], [], []>} : vector<4x8xf32>, vector<8x32xf32>, vector<4x32xf32> -> vector<4x32xf32>
    %64 = vector.extract_strided_slice %63 {offsets = [0, 0], sizes = [2, 32], strides = [1, 1]} : vector<4x32xf32> to vector<2x32xf32>
    %65 = vector.extract_strided_slice %63 {offsets = [2, 0], sizes = [2, 32], strides = [1, 1]} : vector<4x32xf32> to vector<2x32xf32>
    %66 = arith.addf %64, %65 : vector<2x32xf32>
    %67 = arith.negf %66 : vector<2x32xf32>
    %68 = math.exp %67 : vector<2x32xf32>
    %cst_36 = arith.constant 1.000000e+00 : f32
    %69 = vector.broadcast %cst_36 : f32 to vector<2x32xf32>
    %70 = arith.addf %69, %68 : vector<2x32xf32>
    %71 = arith.divf %69, %70 : vector<2x32xf32>
    %72 = vector.shape_cast %71 : vector<2x32xf32> to vector<2x32x1xf32>
    %73 = vector.broadcast %72 : vector<2x32x1xf32> to vector<2x32x256xf32>
    %74 = arith.mulf %73, %52 : vector<2x32x256xf32>
    %c0_37 = arith.constant 0 : index
    %c0_38 = arith.constant 0 : index
    %c0_39 = arith.constant 0 : index
    %75 = vector.load %arg8[%c0_37, %c0_38, %c0_39] : memref<2x32x256xf32, #tpu.memory_space<vmem>>, vector<2x32x256xf32>
    tpu.vector_store %arg8[%c0_37, %c0_38, %c0_39], %74 {strides = array<i32>} : memref<2x32x256xf32, #tpu.memory_space<vmem>>, vector<2x32x256xf32>,
    return
  }
  func.func @transform_0(%arg0: i32) -> (i32, i32, i32) {
    %c0_i32 = arith.constant 0 : i32
    %c0_i32_0 = arith.constant 0 : i32
    %c0_i32_1 = arith.constant 0 : i32
    return %arg0, %c0_i32, %c0_i32_0 : i32, i32, i32
  }
  func.func @transform_1(%arg0: i32) -> (i32, i32) {
    %c0_i32 = arith.constant 0 : i32
    %c0_i32_0 = arith.constant 0 : i32
    %c0_i32_1 = arith.constant 0 : i32
    return %c0_i32, %c0_i32_0 : i32, i32
  }
  func.func @transform_2(%arg0: i32) -> (i32, i32) {
    %c0_i32 = arith.constant 0 : i32
    %c0_i32_0 = arith.constant 0 : i32
    %c0_i32_1 = arith.constant 0 : i32
    return %c0_i32, %c0_i32_0 : i32, i32
  }
  func.func @transform_3(%arg0: i32) -> (i32, i32) {
    %c0_i32 = arith.constant 0 : i32
    %c0_i32_0 = arith.constant 0 : i32
    %c0_i32_1 = arith.constant 0 : i32
    return %c0_i32, %c0_i32_0 : i32, i32
  }
  func.func @transform_4(%arg0: i32) -> (i32, i32) {
    %c0_i32 = arith.constant 0 : i32
    %c0_i32_0 = arith.constant 0 : i32
    %c0_i32_1 = arith.constant 0 : i32
    return %c0_i32, %c0_i32_0 : i32, i32
  }
  func.func @transform_5(%arg0: i32) -> (i32, i32) {
    %c0_i32 = arith.constant 0 : i32
    %c0_i32_0 = arith.constant 0 : i32
    %c0_i32_1 = arith.constant 0 : i32
    return %c0_i32, %c0_i32_0 : i32, i32
  }
  func.func @transform_6(%arg0: i32) -> (i32, i32) {
    %c0_i32 = arith.constant 0 : i32
    %c0_i32_0 = arith.constant 0 : i32
    %c0_i32_1 = arith.constant 0 : i32
    return %c0_i32, %c0_i32_0 : i32, i32
  }
  func.func @transform_7(%arg0: i32) -> (i32, i32, i32) {
    %c0_i32 = arith.constant 0 : i32
    %c0_i32_0 = arith.constant 0 : i32
    %c0_i32_1 = arith.constant 0 : i32
    return %arg0, %c0_i32, %c0_i32_0 : i32, i32, i32
  }
}

</mosaic_0001>

<llo_original>
// kernel: dcbam_forward.1
$region0: #{dcbam_forward.1}
  #allocation0 [shape = 'u32[]', space=smem, size = 0x4, offset = 0x4, fixed_abs, tag = 'smem constant byte address 0x4 - core index']
  #allocation1 [shape = 'u32[72,128]{1,0:T(1,128)}', space=vmem, size = 0x9000, scoped, tag = 'internal scratch']
  %s0 = inlined_call_operand.vmem [shape: f32[2,32,256], index: 0, kind: input, shape index: {}]
  %s1 = inlined_call_operand.vmem [shape: f32[32,8], index: 1, kind: input, shape index: {}]
  %s2 = inlined_call_operand.vmem [shape: f32[8,32], index: 2, kind: input, shape index: {}]
  %s3 = inlined_call_operand.vmem [shape: f32[32,8], index: 3, kind: input, shape index: {}]
  %s4 = inlined_call_operand.vmem [shape: f32[8,32], index: 4, kind: input, shape index: {}]
  %s5 = inlined_call_operand.vmem [shape: f32[512,256], index: 5, kind: input, shape index: {}]
  %s6 = inlined_call_operand.vmem [shape: f32[512,256], index: 6, kind: input, shape index: {}]
  %s7 = inlined_call_operand.vmem [shape: f32[2,32,256], index: 7, kind: output, shape index: {}]
  %s8 = sld [smem:[#allocation0]]
  $region38: #{dcbam_forward.1} parent=0
    _
  %s10 = ssub.s32 1, %s8
  %s11 = scalar_select 0, %s10, %s8
  // Predicated region
  $region2: #{dcbam_forward.1} parent=0 // pred_check
    _
  $region3: #{dcbam_forward.1} parent=0 // pred_check_branch
    %13 = sbr.rel (0) target = $region5
  $region4: #{dcbam_forward.1} parent=0 // pred_region
    _
  $region5: #{dcbam_forward.1} parent=0 // pred_fallthru
    _
  // Predicated region
  $region6: #{dcbam_forward.1} parent=0 // pred_check
    _
  $region7: #{dcbam_forward.1} parent=0 // pred_check_branch
    %15 = sbr.rel (0) target = $region9
  $region8: #{dcbam_forward.1} parent=0 // pred_region
    _
  $region9: #{dcbam_forward.1} parent=0 // pred_fallthru
    _
  // Predicated region
  $region10: #{dcbam_forward.1} parent=0 // pred_check
    _
  $region11: #{dcbam_forward.1} parent=0 // pred_check_branch
    %17 = sbr.rel (0) target = $region13
  $region12: #{dcbam_forward.1} parent=0 // pred_region
    _
  $region13: #{dcbam_forward.1} parent=0 // pred_fallthru
    _
  // Predicated region
  $region14: #{dcbam_forward.1} parent=0 // pred_check
    _
  $region15: #{dcbam_forward.1} parent=0 // pred_check_branch
    %19 = sbr.rel (0) target = $region17
  $region16: #{dcbam_forward.1} parent=0 // pred_region
    _
  $region17: #{dcbam_forward.1} parent=0 // pred_fallthru
    _
  // Predicated region
  $region18: #{dcbam_forward.1} parent=0 // pred_check
    _
  $region19: #{dcbam_forward.1} parent=0 // pred_check_branch
    %21 = sbr.rel (0) target = $region21
  $region20: #{dcbam_forward.1} parent=0 // pred_region
    _
  $region21: #{dcbam_forward.1} parent=0 // pred_fallthru
    _
  // Predicated region
  $region22: #{dcbam_forward.1} parent=0 // pred_check
    _
  $region23: #{dcbam_forward.1} parent=0 // pred_check_branch
    %23 = sbr.rel (0) target = $region25
  $region24: #{dcbam_forward.1} parent=0 // pred_region
    _
  $region25: #{dcbam_forward.1} parent=0 // pred_fallthru
    _
  // Predicated region
  $region26: #{dcbam_forward.1} parent=0 // pred_check
    _
  $region27: #{dcbam_forward.1} parent=0 // pred_check_branch
    %25 = sbr.rel (0) target = $region29
  $region28: #{dcbam_forward.1} parent=0 // pred_region
    _
  $region29: #{dcbam_forward.1} parent=0 // pred_fallthru
    _
  %v26 = vld [vmem:[%s0] sm:$0xff]
  %v27 = vld [vmem:[%s0 + $0x8] sm:$0xff]
  %v28 = vld [vmem:[%s0 + $0x10] sm:$0xff]
  %v29 = vld [vmem:[%s0 + $0x18] sm:$0xff]
  %v30 = vld [vmem:[%s0 + $0x20] sm:$0xff]
  %v31 = vld [vmem:[%s0 + $0x28] sm:$0xff]
  %v32 = vld [vmem:[%s0 + $0x30] sm:$0xff]
  %v33 = vld [vmem:[%s0 + $0x38] sm:$0xff]
  %v34 = vld [vmem:[%s0 + $0x40] sm:$0xff]
  %v35 = vld [vmem:[%s0 + $0x48] sm:$0xff]
  %v36 = vld [vmem:[%s0 + $0x50] sm:$0xff]
  %v37 = vld [vmem:[%s0 + $0x58] sm:$0xff]
  %v38 = vld [vmem:[%s0 + $0x60] sm:$0xff]
  %v39 = vld [vmem:[%s0 + $0x68] sm:$0xff]
  %v40 = vld [vmem:[%s0 + $0x70] sm:$0xff]
  %v41 = vld [vmem:[%s0 + $0x78] sm:$0xff]
  %v42 = vld [vmem:[%s1] sm:$0xff]
  %v43 = vld [vmem:[%s1 + $0x8] sm:$0xff]
  %v44 = vld [vmem:[%s1 + $0x10] sm:$0xff]
  %v45 = vld [vmem:[%s1 + $0x18] sm:$0xff]
  %v46 = vld [vmem:[%s2] sm:$0xff]
  %v47 = vadd.f32 %v26, %v27
  %48 = vadd.xlane.f32.xlu0 %v47
  %v49 = vpop.xlane.xlu0 %48
  %v50 = vadd.f32 %v28, %v29
  %51 = vadd.xlane.f32.xlu0 %v50
  %v52 = vpop.xlane.xlu0 %51
  %v53 = vadd.f32 %v30, %v31
  %54 = vadd.xlane.f32.xlu0 %v53
  %v55 = vpop.xlane.xlu0 %54
  %v56 = vadd.f32 %v32, %v33
  %57 = vadd.xlane.f32.xlu0 %v56
  %v58 = vpop.xlane.xlu0 %57
  %v59 = vadd.f32 %v34, %v35
  %60 = vadd.xlane.f32.xlu0 %v59
  %v61 = vpop.xlane.xlu0 %60
  %v62 = vadd.f32 %v36, %v37
  %63 = vadd.xlane.f32.xlu0 %v62
  %v64 = vpop.xlane.xlu0 %63
  %v65 = vadd.f32 %v38, %v39
  %66 = vadd.xlane.f32.xlu0 %v65
  %v67 = vpop.xlane.xlu0 %66
  %v68 = vadd.f32 %v40, %v41
  %69 = vadd.xlane.f32.xlu0 %v68
  %v70 = vpop.xlane.xlu0 %69
  %v71 = vrcp.pop 256.0
  %v72 = vmul.f32 256.0, %v71
  %v73 = vsub.f32 1.0, %v72
  %v74 = vmul.f32 %v71, %v73
  %v75 = vadd.f32 %v71, %v74
  %vm76 = vweird.f32 %v71
  %v77 = vsel %vm76, %v71, %v75
  %v78 = vmul.f32 %v49, %v77
  %v79 = vmul.f32 %v52, %v77
  %v80 = vmul.f32 %v55, %v77
  %v81 = vmul.f32 %v58, %v77
  %v82 = vmul.f32 %v61, %v77
  %v83 = vmul.f32 %v64, %v77
  %v84 = vmul.f32 %v67, %v77
  %v85 = vmul.f32 %v70, %v77
  %v86 = vmax.f32 %v26, %v27
  %87 = vmax.xlane.f32.xlu0 %v86
  %v88 = vpop.xlane.xlu0 %87
  %v89 = vmax.f32 %v28, %v29
  %90 = vmax.xlane.f32.xlu0 %v89
  %v91 = vpop.xlane.xlu0 %90
  %v92 = vmax.f32 %v30, %v31
  %93 = vmax.xlane.f32.xlu0 %v92
  %v94 = vpop.xlane.xlu0 %93
  %v95 = vmax.f32 %v32, %v33
  %96 = vmax.xlane.f32.xlu0 %v95
  %v97 = vpop.xlane.xlu0 %96
  %v98 = vmax.f32 %v34, %v35
  %99 = vmax.xlane.f32.xlu0 %v98
  %v100 = vpop.xlane.xlu0 %99
  %v101 = vmax.f32 %v36, %v37
  %102 = vmax.xlane.f32.xlu0 %v101
  %v103 = vpop.xlane.xlu0 %102
  %v104 = vmax.f32 %v38, %v39
  %105 = vmax.xlane.f32.xlu0 %v104
  %v106 = vpop.xlane.xlu0 %105
  %v107 = vmax.f32 %v40, %v41
  %108 = vmax.xlane.f32.xlu0 %v107
  %v109 = vpop.xlane.xlu0 %108
  %v118 = vlaneseq
  %v119 = vand.u32 %v118, 127
  %v120 = vperm.slane %v78, %v119
  %v121 = vadd.s32 %v119, 4294967288
  %v122 = vperm.slane %v79, %v121
  %vm123 = vcmask 130112
  %v124 = vsel %vm123, %v122, %v120
  %v125 = vadd.s32 %v119, 4294967280
  %v126 = vperm.slane %v80, %v125
  %vm127 = vcmask 195712
  %v128 = vsel %vm127, %v126, %v124
  %v129 = vadd.s32 %v119, 4294967272
  %v130 = vperm.slane %v81, %v129
  %vm131 = vcmask 261312
  %v132 = vsel %vm131, %v130, %v128
  %v133 = vperm.slane %v82, %v119
  %v134 = vperm.slane %v83, %v121
  %v135 = vsel %vm123, %v134, %v133
  %v136 = vperm.slane %v84, %v125
  %v137 = vsel %vm127, %v136, %v135
  %v138 = vperm.slane %v85, %v129
  %v139 = vsel %vm131, %v138, %v137
  %vm140 = vcmask 1041409
  %v141 = vsel %vm140, %v139, %v132
  %v151 = vperm.slane %v88, %v119
  %v152 = vperm.slane %v91, %v121
  %v153 = vsel %vm123, %v152, %v151
  %v154 = vperm.slane %v94, %v125
  %v155 = vsel %vm127, %v154, %v153
  %v156 = vperm.slane %v97, %v129
  %v157 = vsel %vm131, %v156, %v155
  %v158 = vperm.slane %v100, %v119
  %v159 = vperm.slane %v103, %v121
  %v160 = vsel %vm123, %v159, %v158
  %v161 = vperm.slane %v106, %v125
  %v162 = vsel %vm127, %v161, %v160
  %v163 = vperm.slane %v109, %v129
  %v164 = vsel %vm131, %v163, %v162
  %vm165 = vcmask 1043459
  %v166 = vsel %vm165, %v164, %v157
  %vm168 = vcmask 1041408
  %v169 = vsel %vm168, %v141, %v166
  %vm170 = vcmask 261120
  %v172 = vsel %vm170, %v169, 0
  %174 = vmatpush.msra.mxu0 0.0
  %175 = vmatpush.msra.mxu0 0.0
  %176 = vmatpush.msra.mxu0 0.0
  %177 = vmatpush.msra.mxu0 0.0
  %178 = vmatpush.msra.mxu0 0.0
  %179 = vmatpush.msra.mxu0 0.0
  %180 = vmatpush.msra.mxu0 0.0
  %181 = vmatpush.msra.mxu0 0.0
  %182 = vmatpush.msra.mxu0 0.0
  %183 = vmatpush.msra.mxu0 0.0
  %184 = vmatpush.msra.mxu0 0.0
  %185 = vmatpush.msra.mxu0 0.0
  %186 = vmatpush.msra.mxu0 %v45
  %187 = vmatpush.msra.mxu0 %v44
  %188 = vmatpush.msra.mxu0 %v43
  %189 = vmatpush.msra.mxu0 %v42
  %190 = vmatmul.f32.gmra.mxu0 %v172
  %v191 = vpop.f32.mrf.mxu0
  %v192 = vadd.f32 0.0, %v191
  %193 = vdwg.mxu0
  %v194 = vmax.f32 %v192, 0.0
  %vm195 = vcmask 64512
  %v197 = vsel %vm195, %v194, 0
  %199 = vmatpush.msra.mxu0 0.0
  %200 = vmatpush.msra.mxu0 0.0
  %201 = vmatpush.msra.mxu0 0.0
  %202 = vmatpush.msra.mxu0 0.0
  %203 = vmatpush.msra.mxu0 0.0
  %204 = vmatpush.msra.mxu0 0.0
  %205 = vmatpush.msra.mxu0 0.0
  %206 = vmatpush.msra.mxu0 0.0
  %207 = vmatpush.msra.mxu0 0.0
  %208 = vmatpush.msra.mxu0 0.0
  %209 = vmatpush.msra.mxu0 0.0
  %210 = vmatpush.msra.mxu0 0.0
  %211 = vmatpush.msra.mxu0 0.0
  %212 = vmatpush.msra.mxu0 0.0
  %213 = vmatpush.msra.mxu0 0.0
  %214 = vmatpush.msra.mxu0 %v46
  %215 = vmatmul.f32.gmra.mxu0 %v197
  %v216 = vpop.f32.mrf.mxu0
  %v217 = vadd.f32 0.0, %v216
  %218 = vdwg.mxu0
  %v220 = vrot.slane %v217, 2
  %v222 = vadd.f32 %v217, %v220
  %v223 = vxor.u32 %v222, 2147483648
  %v224 = vmul.f32 %v223, 1.442695
  %v225 = vpow.pop %v224
  %v226 = vadd.f32 %v225, 1.0
  %v227 = vrcp.pop %v226
  %v228 = vmul.f32 %v226, %v227
  %v229 = vsub.f32 1.0, %v228
  %v230 = vmul.f32 %v227, %v229
  %v231 = vadd.f32 %v227, %v230
  %vm232 = vweird.f32 %v226
  %vm233 = vweird.f32 %v227
  %vm234 = vmor %vm232, %vm233
  %v235 = vsel %vm234, %v227, %v231
  %v236 = vand.u32 2147483647, %v226
  %vm237 = vcmp.eq.f32.partialorder %v236, 8.507059e+37
  %v238 = vand.u32 %v226, 2147483648
  %v239 = vor.u32 1.1754944e-38, %v238
  %v240 = vsel %vm237, %v239, %v235
  %v241 = vmul.f32 1.0, %v240
  %v242 = vperm.slane %v241, 0
  %v243 = vlaneseq
  %v244 = vshrl.u32 %v243, 7
  %246 = vset.pattern.permute.xlu0 %v244
  %247 = vperm.xlu0 %246, %v242
  %v248 = vpop.permute.xlu0 %247
  %v249 = vlaneseq
  %v250 = vshrl.u32 %v249, 7
  %v251 = vadd.s32 %v250, 8
  %252 = vset.pattern.permute.xlu0 %v251
  %253 = vperm.xlu0 %252, %v242
  %v254 = vpop.permute.xlu0 %253
  %v255 = vlaneseq
  %v256 = vshrl.u32 %v255, 7
  %v257 = vadd.s32 %v256, 16
  %258 = vset.pattern.permute.xlu0 %v257
  %259 = vperm.xlu0 %258, %v242
  %v260 = vpop.permute.xlu0 %259
  %v261 = vlaneseq
  %v262 = vshrl.u32 %v261, 7
  %v263 = vadd.s32 %v262, 24
  %264 = vset.pattern.permute.xlu0 %v263
  %265 = vperm.xlu0 %264, %v242
  %v266 = vpop.permute.xlu0 %265
  %v267 = vperm.slane %v241, 1
  %v268 = vlaneseq
  %v269 = vshrl.u32 %v268, 7
  %271 = vset.pattern.permute.xlu0 %v269
  %272 = vperm.xlu0 %271, %v267
  %v273 = vpop.permute.xlu0 %272
  %v274 = vlaneseq
  %v275 = vshrl.u32 %v274, 7
  %v276 = vadd.s32 %v275, 8
  %277 = vset.pattern.permute.xlu0 %v276
  %278 = vperm.xlu0 %277, %v267
  %v279 = vpop.permute.xlu0 %278
  %v280 = vlaneseq
  %v281 = vshrl.u32 %v280, 7
  %v282 = vadd.s32 %v281, 16
  %283 = vset.pattern.permute.xlu0 %v282
  %284 = vperm.xlu0 %283, %v267
  %v285 = vpop.permute.xlu0 %284
  %v286 = vlaneseq
  %v287 = vshrl.u32 %v286, 7
  %v288 = vadd.s32 %v287, 24
  %289 = vset.pattern.permute.xlu0 %v288
  %290 = vperm.xlu0 %289, %v267
  %v291 = vpop.permute.xlu0 %290
  %v292 = vld [vmem:[%s5] sm:$0xff]
  %v293 = vld [vmem:[%s5 + $0x8] sm:$0xff]
  %v294 = vld [vmem:[%s5 + $0x10] sm:$0xff]
  %v295 = vld [vmem:[%s5 + $0x18] sm:$0xff]
  %v296 = vld [vmem:[%s5 + $0x20] sm:$0xff]
  %v297 = vld [vmem:[%s5 + $0x28] sm:$0xff]
  %v298 = vld [vmem:[%s5 + $0x30] sm:$0xff]
  %v299 = vld [vmem:[%s5 + $0x38] sm:$0xff]
  %v300 = vld [vmem:[%s5 + $0x40] sm:$0xff]
  %v301 = vld [vmem:[%s5 + $0x48] sm:$0xff]
  %v302 = vld [vmem:[%s5 + $0x50] sm:$0xff]
  %v303 = vld [vmem:[%s5 + $0x58] sm:$0xff]
  %v304 = vld [vmem:[%s5 + $0x60] sm:$0xff]
  %v305 = vld [vmem:[%s5 + $0x68] sm:$0xff]
  %v306 = vld [vmem:[%s5 + $0x70] sm:$0xff]
  %v307 = vld [vmem:[%s5 + $0x78] sm:$0xff]
  %v308 = vld [vmem:[%s5 + $0x80] sm:$0xff]
  %v309 = vld [vmem:[%s5 + $0x88] sm:$0xff]
  %v310 = vld [vmem:[%s5 + $0x90] sm:$0xff]
  %v311 = vld [vmem:[%s5 + $0x98] sm:$0xff]
  %v312 = vld [vmem:[%s5 + $0xa0] sm:$0xff]
  %v313 = vld [vmem:[%s5 + $0xa8] sm:$0xff]
  %v314 = vld [vmem:[%s5 + $0xb0] sm:$0xff]
  %v315 = vld [vmem:[%s5 + $0xb8] sm:$0xff]
  %v316 = vld [vmem:[%s5 + $0xc0] sm:$0xff]
  %v317 = vld [vmem:[%s5 + $0xc8] sm:$0xff]
  %v318 = vld [vmem:[%s5 + $0xd0] sm:$0xff]
  %v319 = vld [vmem:[%s5 + $0xd8] sm:$0xff]
  %v320 = vld [vmem:[%s5 + $0xe0] sm:$0xff]
  %v321 = vld [vmem:[%s5 + $0xe8] sm:$0xff]
  %v322 = vld [vmem:[%s5 + $0xf0] sm:$0xff]
  %v323 = vld [vmem:[%s5 + $0xf8] sm:$0xff]
  %v324 = vld [vmem:[%s5 + $0x100] sm:$0xff]
  %v325 = vld [vmem:[%s5 + $0x108] sm:$0xff]
  %v326 = vld [vmem:[%s5 + $0x110] sm:$0xff]
  %v327 = vld [vmem:[%s5 + $0x118] sm:$0xff]
  %v328 = vld [vmem:[%s5 + $0x120] sm:$0xff]
  %v329 = vld [vmem:[%s5 + $0x128] sm:$0xff]
  %v330 = vld [vmem:[%s5 + $0x130] sm:$0xff]
  %v331 = vld [vmem:[%s5 + $0x138] sm:$0xff]
  %v332 = vld [vmem:[%s5 + $0x140] sm:$0xff]
  %v333 = vld [vmem:[%s5 + $0x148] sm:$0xff]
  %v334 = vld [vmem:[%s5 + $0x150] sm:$0xff]
  %v335 = vld [vmem:[%s5 + $0x158] sm:$0xff]
  %v336 = vld [vmem:[%s5 + $0x160] sm:$0xff]
  %v337 = vld [vmem:[%s5 + $0x168] sm:$0xff]
  %v338 = vld [vmem:[%s5 + $0x170] sm:$0xff]
  %v339 = vld [vmem:[%s5 + $0x178] sm:$0xff]
  %v340 = vld [vmem:[%s5 + $0x180] sm:$0xff]
  %v341 = vld [vmem:[%s5 + $0x188] sm:$0xff]
  %v342 = vld [vmem:[%s5 + $0x190] sm:$0xff]
  %v343 = vld [vmem:[%s5 + $0x198] sm:$0xff]
  %v344 = vld [vmem:[%s5 + $0x1a0] sm:$0xff]
  %v345 = vld [vmem:[%s5 + $0x1a8] sm:$0xff]
  %v346 = vld [vmem:[%s5 + $0x1b0] sm:$0xff]
  %v347 = vld [vmem:[%s5 + $0x1b8] sm:$0xff]
  %v348 = vld [vmem:[%s5 + $0x1c0] sm:$0xff]
  %v349 = vld [vmem:[%s5 + $0x1c8] sm:$0xff]
  %v350 = vld [vmem:[%s5 + $0x1d0] sm:$0xff]
  %v351 = vld [vmem:[%s5 + $0x1d8] sm:$0xff]
  %v352 = vld [vmem:[%s5 + $0x1e0] sm:$0xff]
  %v353 = vld [vmem:[%s5 + $0x1e8] sm:$0xff]
  %v354 = vld [vmem:[%s5 + $0x1f0] sm:$0xff]
  %v355 = vld [vmem:[%s5 + $0x1f8] sm:$0xff]
  %v356 = vld [vmem:[%s5 + $0x200] sm:$0xff]
  %v357 = vld [vmem:[%s5 + $0x208] sm:$0xff]
  %v358 = vld [vmem:[%s5 + $0x210] sm:$0xff]
  %v359 = vld [vmem:[%s5 + $0x218] sm:$0xff]
  %v360 = vld [vmem:[%s5 + $0x220] sm:$0xff]
  %v361 = vld [vmem:[%s5 + $0x228] sm:$0xff]
  %v362 = vld [vmem:[%s5 + $0x230] sm:$0xff]
  %v363 = vld [vmem:[%s5 + $0x238] sm:$0xff]
  %v364 = vld [vmem:[%s5 + $0x240] sm:$0xff]
  %v365 = vld [vmem:[%s5 + $0x248] sm:$0xff]
  %v366 = vld [vmem:[%s5 + $0x250] sm:$0xff]
  %v367 = vld [vmem:[%s5 + $0x258] sm:$0xff]
  %v368 = vld [vmem:[%s5 + $0x260] sm:$0xff]
  %v369 = vld [vmem:[%s5 + $0x268] sm:$0xff]
  %v370 = vld [vmem:[%s5 + $0x270] sm:$0xff]
  %v371 = vld [vmem:[%s5 + $0x278] sm:$0xff]
  %v372 = vld [vmem:[%s5 + $0x280] sm:$0xff]
  %v373 = vld [vmem:[%s5 + $0x288] sm:$0xff]
  %v374 = vld [vmem:[%s5 + $0x290] sm:$0xff]
  %v375 = vld [vmem:[%s5 + $0x298] sm:$0xff]
  %v376 = vld [vmem:[%s5 + $0x2a0] sm:$0xff]
  %v377 = vld [vmem:[%s5 + $0x2a8] sm:$0xff]
  %v378 = vld [vmem:[%s5 + $0x2b0] sm:$0xff]
  %v379 = vld [vmem:[%s5 + $0x2b8] sm:$0xff]
  %v380 = vld [vmem:[%s5 + $0x2c0] sm:$0xff]
  %v381 = vld [vmem:[%s5 + $0x2c8] sm:$0xff]
  %v382 = vld [vmem:[%s5 + $0x2d0] sm:$0xff]
  %v383 = vld [vmem:[%s5 + $0x2d8] sm:$0xff]
  %v384 = vld [vmem:[%s5 + $0x2e0] sm:$0xff]
  %v385 = vld [vmem:[%s5 + $0x2e8] sm:$0xff]
  %v386 = vld [vmem:[%s5 + $0x2f0] sm:$0xff]
  %v387 = vld [vmem:[%s5 + $0x2f8] sm:$0xff]
  %v388 = vld [vmem:[%s5 + $0x300] sm:$0xff]
  %v389 = vld [vmem:[%s5 + $0x308] sm:$0xff]
  %v390 = vld [vmem:[%s5 + $0x310] sm:$0xff]
  %v391 = vld [vmem:[%s5 + $0x318] sm:$0xff]
  %v392 = vld [vmem:[%s5 + $0x320] sm:$0xff]
  %v393 = vld [vmem:[%s5 + $0x328] sm:$0xff]
  %v394 = vld [vmem:[%s5 + $0x330] sm:$0xff]
  %v395 = vld [vmem:[%s5 + $0x338] sm:$0xff]
  %v396 = vld [vmem:[%s5 + $0x340] sm:$0xff]
  %v397 = vld [vmem:[%s5 + $0x348] sm:$0xff]
  %v398 = vld [vmem:[%s5 + $0x350] sm:$0xff]
  %v399 = vld [vmem:[%s5 + $0x358] sm:$0xff]
  %v400 = vld [vmem:[%s5 + $0x360] sm:$0xff]
  %v401 = vld [vmem:[%s5 + $0x368] sm:$0xff]
  %v402 = vld [vmem:[%s5 + $0x370] sm:$0xff]
  %v403 = vld [vmem:[%s5 + $0x378] sm:$0xff]
  %v404 = vld [vmem:[%s5 + $0x380] sm:$0xff]
  %v405 = vld [vmem:[%s5 + $0x388] sm:$0xff]
  %v406 = vld [vmem:[%s5 + $0x390] sm:$0xff]
  %v407 = vld [vmem:[%s5 + $0x398] sm:$0xff]
  %v408 = vld [vmem:[%s5 + $0x3a0] sm:$0xff]
  %v409 = vld [vmem:[%s5 + $0x3a8] sm:$0xff]
  %v410 = vld [vmem:[%s5 + $0x3b0] sm:$0xff]
  %v411 = vld [vmem:[%s5 + $0x3b8] sm:$0xff]
  %v412 = vld [vmem:[%s5 + $0x3c0] sm:$0xff]
  %v413 = vld [vmem:[%s5 + $0x3c8] sm:$0xff]
  %v414 = vld [vmem:[%s5 + $0x3d0] sm:$0xff]
  %v415 = vld [vmem:[%s5 + $0x3d8] sm:$0xff]
  %v416 = vld [vmem:[%s5 + $0x3e0] sm:$0xff]
  %v417 = vld [vmem:[%s5 + $0x3e8] sm:$0xff]
  %v418 = vld [vmem:[%s5 + $0x3f0] sm:$0xff]
  %v419 = vld [vmem:[%s5 + $0x3f8] sm:$0xff]
  %v420 = vadd.f32 %v26, %v28
  %v421 = vadd.f32 %v420, %v30
  %v422 = vadd.f32 %v421, %v32
  %v423 = vrot.slane %v422, 4
  %v424 = vadd.f32 %v422, %v423
  %v425 = vrot.slane %v424, 2
  %v426 = vadd.f32 %v424, %v425
  %v427 = vrot.slane %v426, 1
  %v428 = vadd.f32 %v426, %v427
  %v429 = vadd.f32 %v27, %v29
  %v430 = vadd.f32 %v429, %v31
  %v431 = vadd.f32 %v430, %v33
  %v432 = vrot.slane %v431, 4
  %v433 = vadd.f32 %v431, %v432
  %v434 = vrot.slane %v433, 2
  %v435 = vadd.f32 %v433, %v434
  %v436 = vrot.slane %v435, 1
  %v437 = vadd.f32 %v435, %v436
  %v438 = vadd.f32 %v34, %v36
  %v439 = vadd.f32 %v438, %v38
  %v440 = vadd.f32 %v439, %v40
  %v441 = vrot.slane %v440, 4
  %v442 = vadd.f32 %v440, %v441
  %v443 = vrot.slane %v442, 2
  %v444 = vadd.f32 %v442, %v443
  %v445 = vrot.slane %v444, 1
  %v446 = vadd.f32 %v444, %v445
  %v447 = vadd.f32 %v35, %v37
  %v448 = vadd.f32 %v447, %v39
  %v449 = vadd.f32 %v448, %v41
  %v450 = vrot.slane %v449, 4
  %v451 = vadd.f32 %v449, %v450
  %v452 = vrot.slane %v451, 2
  %v453 = vadd.f32 %v451, %v452
  %v454 = vrot.slane %v453, 1
  %v455 = vadd.f32 %v453, %v454
  %v456 = vrcp.pop 32.0
  %v457 = vmul.f32 32.0, %v456
  %v458 = vsub.f32 1.0, %v457
  %v459 = vmul.f32 %v456, %v458
  %v460 = vadd.f32 %v456, %v459
  %vm461 = vweird.f32 %v456
  %v462 = vsel %vm461, %v456, %v460
  %v463 = vmul.f32 %v428, %v462
  %v464 = vmul.f32 %v437, %v462
  %v465 = vmul.f32 %v446, %v462
  %v466 = vmul.f32 %v455, %v462
  %v467 = vmax.f32 %v26, %v28
  %v468 = vmax.f32 %v467, %v30
  %v469 = vmax.f32 %v468, %v32
  %v470 = vrot.slane %v469, 4
  %v471 = vmax.f32 %v469, %v470
  %v472 = vrot.slane %v471, 2
  %v473 = vmax.f32 %v471, %v472
  %v474 = vrot.slane %v473, 1
  %v475 = vmax.f32 %v473, %v474
  %v476 = vmax.f32 %v27, %v29
  %v477 = vmax.f32 %v476, %v31
  %v478 = vmax.f32 %v477, %v33
  %v479 = vrot.slane %v478, 4
  %v480 = vmax.f32 %v478, %v479
  %v481 = vrot.slane %v480, 2
  %v482 = vmax.f32 %v480, %v481
  %v483 = vrot.slane %v482, 1
  %v484 = vmax.f32 %v482, %v483
  %v485 = vmax.f32 %v34, %v36
  %v486 = vmax.f32 %v485, %v38
  %v487 = vmax.f32 %v486, %v40
  %v488 = vrot.slane %v487, 4
  %v489 = vmax.f32 %v487, %v488
  %v490 = vrot.slane %v489, 2
  %v491 = vmax.f32 %v489, %v490
  %v492 = vrot.slane %v491, 1
  %v493 = vmax.f32 %v491, %v492
  %v494 = vmax.f32 %v35, %v37
  %v495 = vmax.f32 %v494, %v39
  %v496 = vmax.f32 %v495, %v41
  %v497 = vrot.slane %v496, 4
  %v498 = vmax.f32 %v496, %v497
  %v499 = vrot.slane %v498, 2
  %v500 = vmax.f32 %v498, %v499
  %v501 = vrot.slane %v500, 1
  %v502 = vmax.f32 %v500, %v501
  %v507 = vsel %vm140, %v465, %v463
  %v508 = vsel %vm140, %v466, %v464
  %v515 = vsel %vm140, %v493, %v475
  %v516 = vsel %vm140, %v502, %v484
  %519 = vmatpush.msra.mxu0 %v322
  %520 = vmatpush.msra.mxu0 %v320
  %521 = vmatpush.msra.mxu0 %v318
  %522 = vmatpush.msra.mxu0 %v316
  %523 = vmatpush.msra.mxu0 %v314
  %524 = vmatpush.msra.mxu0 %v312
  %525 = vmatpush.msra.mxu0 %v310
  %526 = vmatpush.msra.mxu0 %v308
  %527 = vmatpush.msra.mxu0 %v306
  %528 = vmatpush.msra.mxu0 %v304
  %529 = vmatpush.msra.mxu0 %v302
  %530 = vmatpush.msra.mxu0 %v300
  %531 = vmatpush.msra.mxu0 %v298
  %532 = vmatpush.msra.mxu0 %v296
  %533 = vmatpush.msra.mxu0 %v294
  %534 = vmatpush.msra.mxu0 %v292
  %535 = vmatmul.f32.gmra.mxu0 %v507
  %v536 = vpop.f32.mrf.mxu0
  %v537 = vadd.f32 0.0, %v536
  %538 = vdwg.mxu0
  %539 = vmatpush.msra.mxu0 %v354
  %540 = vmatpush.msra.mxu0 %v352
  %541 = vmatpush.msra.mxu0 %v350
  %542 = vmatpush.msra.mxu0 %v348
  %543 = vmatpush.msra.mxu0 %v346
  %544 = vmatpush.msra.mxu0 %v344
  %545 = vmatpush.msra.mxu0 %v342
  %546 = vmatpush.msra.mxu0 %v340
  %547 = vmatpush.msra.mxu0 %v338
  %548 = vmatpush.msra.mxu0 %v336
  %549 = vmatpush.msra.mxu0 %v334
  %550 = vmatpush.msra.mxu0 %v332
  %551 = vmatpush.msra.mxu0 %v330
  %552 = vmatpush.msra.mxu0 %v328
  %553 = vmatpush.msra.mxu0 %v326
  %554 = vmatpush.msra.mxu0 %v324
  %555 = vmatmul.f32.gmra.mxu0 %v508
  %v556 = vpop.f32.mrf.mxu0
  %v557 = vadd.f32 %v537, %v556
  %558 = vdwg.mxu0
  %559 = vmatpush.msra.mxu0 %v386
  %560 = vmatpush.msra.mxu0 %v384
  %561 = vmatpush.msra.mxu0 %v382
  %562 = vmatpush.msra.mxu0 %v380
  %563 = vmatpush.msra.mxu0 %v378
  %564 = vmatpush.msra.mxu0 %v376
  %565 = vmatpush.msra.mxu0 %v374
  %566 = vmatpush.msra.mxu0 %v372
  %567 = vmatpush.msra.mxu0 %v370
  %568 = vmatpush.msra.mxu0 %v368
  %569 = vmatpush.msra.mxu0 %v366
  %570 = vmatpush.msra.mxu0 %v364
  %571 = vmatpush.msra.mxu0 %v362
  %572 = vmatpush.msra.mxu0 %v360
  %573 = vmatpush.msra.mxu0 %v358
  %574 = vmatpush.msra.mxu0 %v356
  %575 = vmatmul.f32.gmra.mxu0 %v515
  %v576 = vpop.f32.mrf.mxu0
  %v577 = vadd.f32 %v557, %v576
  %578 = vdwg.mxu0
  %579 = vmatpush.msra.mxu0 %v418
  %580 = vmatpush.msra.mxu0 %v416
  %581 = vmatpush.msra.mxu0 %v414
  %582 = vmatpush.msra.mxu0 %v412
  %583 = vmatpush.msra.mxu0 %v410
  %584 = vmatpush.msra.mxu0 %v408
  %585 = vmatpush.msra.mxu0 %v406
  %586 = vmatpush.msra.mxu0 %v404
  %587 = vmatpush.msra.mxu0 %v402
  %588 = vmatpush.msra.mxu0 %v400
  %589 = vmatpush.msra.mxu0 %v398
  %590 = vmatpush.msra.mxu0 %v396
  %591 = vmatpush.msra.mxu0 %v394
  %592 = vmatpush.msra.mxu0 %v392
  %593 = vmatpush.msra.mxu0 %v390
  %594 = vmatpush.msra.mxu0 %v388
  %595 = vmatmul.f32.gmra.mxu0 %v516
  %v596 = vpop.f32.mrf.mxu0
  %v597 = vadd.f32 %v577, %v596
  %598 = vdwg.mxu0
  %599 = vmatpush.msra.mxu0 %v323
  %600 = vmatpush.msra.mxu0 %v321
  %601 = vmatpush.msra.mxu0 %v319
  %602 = vmatpush.msra.mxu0 %v317
  %603 = vmatpush.msra.mxu0 %v315
  %604 = vmatpush.msra.mxu0 %v313
  %605 = vmatpush.msra.mxu0 %v311
  %606 = vmatpush.msra.mxu0 %v309
  %607 = vmatpush.msra.mxu0 %v307
  %608 = vmatpush.msra.mxu0 %v305
  %609 = vmatpush.msra.mxu0 %v303
  %610 = vmatpush.msra.mxu0 %v301
  %611 = vmatpush.msra.mxu0 %v299
  %612 = vmatpush.msra.mxu0 %v297
  %613 = vmatpush.msra.mxu0 %v295
  %614 = vmatpush.msra.mxu0 %v293
  %615 = vmatmul.f32.gmra.mxu0 %v507
  %v616 = vpop.f32.mrf.mxu0
  %v617 = vadd.f32 0.0, %v616
  %618 = vdwg.mxu0
  %619 = vmatpush.msra.mxu0 %v355
  %620 = vmatpush.msra.mxu0 %v353
  %621 = vmatpush.msra.mxu0 %v351
  %622 = vmatpush.msra.mxu0 %v349
  %623 = vmatpush.msra.mxu0 %v347
  %624 = vmatpush.msra.mxu0 %v345
  %625 = vmatpush.msra.mxu0 %v343
  %626 = vmatpush.msra.mxu0 %v341
  %627 = vmatpush.msra.mxu0 %v339
  %628 = vmatpush.msra.mxu0 %v337
  %629 = vmatpush.msra.mxu0 %v335
  %630 = vmatpush.msra.mxu0 %v333
  %631 = vmatpush.msra.mxu0 %v331
  %632 = vmatpush.msra.mxu0 %v329
  %633 = vmatpush.msra.mxu0 %v327
  %634 = vmatpush.msra.mxu0 %v325
  %635 = vmatmul.f32.gmra.mxu0 %v508
  %v636 = vpop.f32.mrf.mxu0
  %v637 = vadd.f32 %v617, %v636
  %638 = vdwg.mxu0
  %639 = vmatpush.msra.mxu0 %v387
  %640 = vmatpush.msra.mxu0 %v385
  %641 = vmatpush.msra.mxu0 %v383
  %642 = vmatpush.msra.mxu0 %v381
  %643 = vmatpush.msra.mxu0 %v379
  %644 = vmatpush.msra.mxu0 %v377
  %645 = vmatpush.msra.mxu0 %v375
  %646 = vmatpush.msra.mxu0 %v373
  %647 = vmatpush.msra.mxu0 %v371
  %648 = vmatpush.msra.mxu0 %v369
  %649 = vmatpush.msra.mxu0 %v367
  %650 = vmatpush.msra.mxu0 %v365
  %651 = vmatpush.msra.mxu0 %v363
  %652 = vmatpush.msra.mxu0 %v361
  %653 = vmatpush.msra.mxu0 %v359
  %654 = vmatpush.msra.mxu0 %v357
  %655 = vmatmul.f32.gmra.mxu0 %v515
  %v656 = vpop.f32.mrf.mxu0
  %v657 = vadd.f32 %v637, %v656
  %658 = vdwg.mxu0
  %659 = vmatpush.msra.mxu0 %v419
  %660 = vmatpush.msra.mxu0 %v417
  %661 = vmatpush.msra.mxu0 %v415
  %662 = vmatpush.msra.mxu0 %v413
  %663 = vmatpush.msra.mxu0 %v411
  %664 = vmatpush.msra.mxu0 %v409
  %665 = vmatpush.msra.mxu0 %v407
  %666 = vmatpush.msra.mxu0 %v405
  %667 = vmatpush.msra.mxu0 %v403
  %668 = vmatpush.msra.mxu0 %v401
  %669 = vmatpush.msra.mxu0 %v399
  %670 = vmatpush.msra.mxu0 %v397
  %671 = vmatpush.msra.mxu0 %v395
  %672 = vmatpush.msra.mxu0 %v393
  %673 = vmatpush.msra.mxu0 %v391
  %674 = vmatpush.msra.mxu0 %v389
  %675 = vmatmul.f32.gmra.mxu0 %v516
  %v676 = vpop.f32.mrf.mxu0
  %v677 = vadd.f32 %v657, %v676
  %678 = vdwg.mxu0
  %v679 = vxor.u32 %v597, 2147483648
  %v680 = vxor.u32 %v677, 2147483648
  %v681 = vmul.f32 %v679, 1.442695
  %v682 = vpow.pop %v681
  %v683 = vmul.f32 %v680, 1.442695
  %v684 = vpow.pop %v683
  %v685 = vadd.f32 %v682, 1.0
  %v686 = vadd.f32 %v684, 1.0
  %v687 = vrcp.pop %v685
  %v688 = vmul.f32 %v685, %v687
  %v689 = vsub.f32 1.0, %v688
  %v690 = vmul.f32 %v687, %v689
  %v691 = vadd.f32 %v687, %v690
  %vm692 = vweird.f32 %v685
  %vm693 = vweird.f32 %v687
  %vm694 = vmor %vm692, %vm693
  %v695 = vsel %vm694, %v687, %v691
  %v696 = vand.u32 2147483647, %v685
  %vm697 = vcmp.eq.f32.partialorder %v696, 8.507059e+37
  %v698 = vand.u32 %v685, 2147483648
  %v699 = vor.u32 1.1754944e-38, %v698
  %v700 = vsel %vm697, %v699, %v695
  %v701 = vmul.f32 1.0, %v700
  %v702 = vrcp.pop %v686
  %v703 = vmul.f32 %v686, %v702
  %v704 = vsub.f32 1.0, %v703
  %v705 = vmul.f32 %v702, %v704
  %v706 = vadd.f32 %v702, %v705
  %vm707 = vweird.f32 %v686
  %vm708 = vweird.f32 %v702
  %vm709 = vmor %vm707, %vm708
  %v710 = vsel %vm709, %v702, %v706
  %v711 = vand.u32 2147483647, %v686
  %vm712 = vcmp.eq.f32.partialorder %v711, 8.507059e+37
  %v713 = vand.u32 %v686, 2147483648
  %v714 = vor.u32 1.1754944e-38, %v713
  %v715 = vsel %vm712, %v714, %v710
  %v716 = vmul.f32 1.0, %v715
  %v719 = vrot.slane %v716, 7
  %vm720 = vcmask 1040384
  %v721 = vsel %vm720, %v701, %v719
  %v722 = vsel %vm140, %v701, %v719
  %v723 = vrot.slane %v722, 1
  %v724 = vperm.slane %v721, 0
  %v725 = vperm.slane %v721, 1
  %v726 = vperm.slane %v723, 0
  %v727 = vperm.slane %v723, 1
  %v732 = vadd.f32 %v248, %v724
  %v733 = vadd.f32 %v248, %v725
  %v734 = vadd.f32 %v254, %v724
  %v735 = vadd.f32 %v254, %v725
  %v736 = vadd.f32 %v260, %v724
  %v737 = vadd.f32 %v260, %v725
  %v738 = vadd.f32 %v266, %v724
  %v739 = vadd.f32 %v266, %v725
  %v740 = vadd.f32 %v273, %v726
  %v741 = vadd.f32 %v273, %v727
  %v742 = vadd.f32 %v279, %v726
  %v743 = vadd.f32 %v279, %v727
  %v744 = vadd.f32 %v285, %v726
  %v745 = vadd.f32 %v285, %v727
  %v746 = vadd.f32 %v291, %v726
  %v747 = vadd.f32 %v291, %v727
  %v748 = vmul.f32 %v732, %v26
  %v749 = vmul.f32 %v733, %v27
  %v750 = vmul.f32 %v734, %v28
  %v751 = vmul.f32 %v735, %v29
  %v752 = vmul.f32 %v736, %v30
  %v753 = vmul.f32 %v737, %v31
  %v754 = vmul.f32 %v738, %v32
  %v755 = vmul.f32 %v739, %v33
  %v756 = vmul.f32 %v740, %v34
  %v757 = vmul.f32 %v741, %v35
  %v758 = vmul.f32 %v742, %v36
  %v759 = vmul.f32 %v743, %v37
  %v760 = vmul.f32 %v744, %v38
  %v761 = vmul.f32 %v745, %v39
  %v762 = vmul.f32 %v746, %v40
  %v763 = vmul.f32 %v747, %v41
  %v764 = vld [vmem:[%s6] sm:$0xff]
  %v765 = vld [vmem:[%s6 + $0x8] sm:$0xff]
  %v766 = vld [vmem:[%s6 + $0x10] sm:$0xff]
  %v767 = vld [vmem:[%s6 + $0x18] sm:$0xff]
  %v768 = vld [vmem:[%s6 + $0x20] sm:$0xff]
  %v769 = vld [vmem:[%s6 + $0x28] sm:$0xff]
  %v770 = vld [vmem:[%s6 + $0x30] sm:$0xff]
  %v771 = vld [vmem:[%s6 + $0x38] sm:$0xff]
  %v772 = vld [vmem:[%s6 + $0x40] sm:$0xff]
  %v773 = vld [vmem:[%s6 + $0x48] sm:$0xff]
  %v774 = vld [vmem:[%s6 + $0x50] sm:$0xff]
  %v775 = vld [vmem:[%s6 + $0x58] sm:$0xff]
  %v776 = vld [vmem:[%s6 + $0x60] sm:$0xff]
  %v777 = vld [vmem:[%s6 + $0x68] sm:$0xff]
  %v778 = vld [vmem:[%s6 + $0x70] sm:$0xff]
  %v779 = vld [vmem:[%s6 + $0x78] sm:$0xff]
  %v780 = vld [vmem:[%s6 + $0x80] sm:$0xff]
  %v781 = vld [vmem:[%s6 + $0x88] sm:$0xff]
  %v782 = vld [vmem:[%s6 + $0x90] sm:$0xff]
  %v783 = vld [vmem:[%s6 + $0x98] sm:$0xff]
  %v784 = vld [vmem:[%s6 + $0xa0] sm:$0xff]
  %v785 = vld [vmem:[%s6 + $0xa8] sm:$0xff]
  %v786 = vld [vmem:[%s6 + $0xb0] sm:$0xff]
  %v787 = vld [vmem:[%s6 + $0xb8] sm:$0xff]
  %v788 = vld [vmem:[%s6 + $0xc0] sm:$0xff]
  %v789 = vld [vmem:[%s6 + $0xc8] sm:$0xff]
  %v790 = vld [vmem:[%s6 + $0xd0] sm:$0xff]
  %v791 = vld [vmem:[%s6 + $0xd8] sm:$0xff]
  %v792 = vld [vmem:[%s6 + $0xe0] sm:$0xff]
  %v793 = vld [vmem:[%s6 + $0xe8] sm:$0xff]
  %v794 = vld [vmem:[%s6 + $0xf0] sm:$0xff]
  %v795 = vld [vmem:[%s6 + $0xf8] sm:$0xff]
  %v796 = vld [vmem:[%s6 + $0x100] sm:$0xff]
  %v797 = vld [vmem:[%s6 + $0x108] sm:$0xff]
  %v798 = vld [vmem:[%s6 + $0x110] sm:$0xff]
  %v799 = vld [vmem:[%s6 + $0x118] sm:$0xff]
  %v800 = vld [vmem:[%s6 + $0x120] sm:$0xff]
  %v801 = vld [vmem:[%s6 + $0x128] sm:$0xff]
  %v802 = vld [vmem:[%s6 + $0x130] sm:$0xff]
  %v803 = vld [vmem:[%s6 + $0x138] sm:$0xff]
  %v804 = vld [vmem:[%s6 + $0x140] sm:$0xff]
  %v805 = vld [vmem:[%s6 + $0x148] sm:$0xff]
  %v806 = vld [vmem:[%s6 + $0x150] sm:$0xff]
  %v807 = vld [vmem:[%s6 + $0x158] sm:$0xff]
  %v808 = vld [vmem:[%s6 + $0x160] sm:$0xff]
  %v809 = vld [vmem:[%s6 + $0x168] sm:$0xff]
  %v810 = vld [vmem:[%s6 + $0x170] sm:$0xff]
  %v811 = vld [vmem:[%s6 + $0x178] sm:$0xff]
  %v812 = vld [vmem:[%s6 + $0x180] sm:$0xff]
  %v813 = vld [vmem:[%s6 + $0x188] sm:$0xff]
  %v814 = vld [vmem:[%s6 + $0x190] sm:$0xff]
  %v815 = vld [vmem:[%s6 + $0x198] sm:$0xff]
  %v816 = vld [vmem:[%s6 + $0x1a0] sm:$0xff]
  %v817 = vld [vmem:[%s6 + $0x1a8] sm:$0xff]
  %v818 = vld [vmem:[%s6 + $0x1b0] sm:$0xff]
  %v819 = vld [vmem:[%s6 + $0x1b8] sm:$0xff]
  %v820 = vld [vmem:[%s6 + $0x1c0] sm:$0xff]
  %v821 = vld [vmem:[%s6 + $0x1c8] sm:$0xff]
  %v822 = vld [vmem:[%s6 + $0x1d0] sm:$0xff]
  %v823 = vld [vmem:[%s6 + $0x1d8] sm:$0xff]
  %v824 = vld [vmem:[%s6 + $0x1e0] sm:$0xff]
  %v825 = vld [vmem:[%s6 + $0x1e8] sm:$0xff]
  %v826 = vld [vmem:[%s6 + $0x1f0] sm:$0xff]
  %v827 = vld [vmem:[%s6 + $0x1f8] sm:$0xff]
  %v828 = vld [vmem:[%s6 + $0x200] sm:$0xff]
  %v829 = vld [vmem:[%s6 + $0x208] sm:$0xff]
  %v830 = vld [vmem:[%s6 + $0x210] sm:$0xff]
  %v831 = vld [vmem:[%s6 + $0x218] sm:$0xff]
  %v832 = vld [vmem:[%s6 + $0x220] sm:$0xff]
  %v833 = vld [vmem:[%s6 + $0x228] sm:$0xff]
  %v834 = vld [vmem:[%s6 + $0x230] sm:$0xff]
  %v835 = vld [vmem:[%s6 + $0x238] sm:$0xff]
  %v836 = vld [vmem:[%s6 + $0x240] sm:$0xff]
  %v837 = vld [vmem:[%s6 + $0x248] sm:$0xff]
  %v838 = vld [vmem:[%s6 + $0x250] sm:$0xff]
  %v839 = vld [vmem:[%s6 + $0x258] sm:$0xff]
  %v840 = vld [vmem:[%s6 + $0x260] sm:$0xff]
  %v841 = vld [vmem:[%s6 + $0x268] sm:$0xff]
  %v842 = vld [vmem:[%s6 + $0x270] sm:$0xff]
  %v843 = vld [vmem:[%s6 + $0x278] sm:$0xff]
  %v844 = vld [vmem:[%s6 + $0x280] sm:$0xff]
  %v845 = vld [vmem:[%s6 + $0x288] sm:$0xff]
  %v846 = vld [vmem:[%s6 + $0x290] sm:$0xff]
  %v847 = vld [vmem:[%s6 + $0x298] sm:$0xff]
  %v848 = vld [vmem:[%s6 + $0x2a0] sm:$0xff]
  %v849 = vld [vmem:[%s6 + $0x2a8] sm:$0xff]
  %v850 = vld [vmem:[%s6 + $0x2b0] sm:$0xff]
  %v851 = vld [vmem:[%s6 + $0x2b8] sm:$0xff]
  %v852 = vld [vmem:[%s6 + $0x2c0] sm:$0xff]
  %v853 = vld [vmem:[%s6 + $0x2c8] sm:$0xff]
  %v854 = vld [vmem:[%s6 + $0x2d0] sm:$0xff]
  %v855 = vld [vmem:[%s6 + $0x2d8] sm:$0xff]
  %v856 = vld [vmem:[%s6 + $0x2e0] sm:$0xff]
  %v857 = vld [vmem:[%s6 + $0x2e8] sm:$0xff]
  %v858 = vld [vmem:[%s6 + $0x2f0] sm:$0xff]
  %v859 = vld [vmem:[%s6 + $0x2f8] sm:$0xff]
  %v860 = vld [vmem:[%s6 + $0x300] sm:$0xff]
  %v861 = vld [vmem:[%s6 + $0x308] sm:$0xff]
  %v862 = vld [vmem:[%s6 + $0x310] sm:$0xff]
  %v863 = vld [vmem:[%s6 + $0x318] sm:$0xff]
  %v864 = vld [vmem:[%s6 + $0x320] sm:$0xff]
  %v865 = vld [vmem:[%s6 + $0x328] sm:$0xff]
  %v866 = vld [vmem:[%s6 + $0x330] sm:$0xff]
  %v867 = vld [vmem:[%s6 + $0x338] sm:$0xff]
  %v868 = vld [vmem:[%s6 + $0x340] sm:$0xff]
  %v869 = vld [vmem:[%s6 + $0x348] sm:$0xff]
  %v870 = vld [vmem:[%s6 + $0x350] sm:$0xff]
  %v871 = vld [vmem:[%s6 + $0x358] sm:$0xff]
  %v872 = vld [vmem:[%s6 + $0x360] sm:$0xff]
  %v873 = vld [vmem:[%s6 + $0x368] sm:$0xff]
  %v874 = vld [vmem:[%s6 + $0x370] sm:$0xff]
  %v875 = vld [vmem:[%s6 + $0x378] sm:$0xff]
  %v876 = vld [vmem:[%s6 + $0x380] sm:$0xff]
  %v877 = vld [vmem:[%s6 + $0x388] sm:$0xff]
  %v878 = vld [vmem:[%s6 + $0x390] sm:$0xff]
  %v879 = vld [vmem:[%s6 + $0x398] sm:$0xff]
  %v880 = vld [vmem:[%s6 + $0x3a0] sm:$0xff]
  %v881 = vld [vmem:[%s6 + $0x3a8] sm:$0xff]
  %v882 = vld [vmem:[%s6 + $0x3b0] sm:$0xff]
  %v883 = vld [vmem:[%s6 + $0x3b8] sm:$0xff]
  %v884 = vld [vmem:[%s6 + $0x3c0] sm:$0xff]
  %v885 = vld [vmem:[%s6 + $0x3c8] sm:$0xff]
  %v886 = vld [vmem:[%s6 + $0x3d0] sm:$0xff]
  %v887 = vld [vmem:[%s6 + $0x3d8] sm:$0xff]
  %v888 = vld [vmem:[%s6 + $0x3e0] sm:$0xff]
  %v889 = vld [vmem:[%s6 + $0x3e8] sm:$0xff]
  %v890 = vld [vmem:[%s6 + $0x3f0] sm:$0xff]
  %v891 = vld [vmem:[%s6 + $0x3f8] sm:$0xff]
  %v892 = vadd.f32 %v748, %v750
  %v893 = vadd.f32 %v892, %v752
  %v894 = vadd.f32 %v893, %v754
  %v895 = vrot.slane %v894, 4
  %v896 = vadd.f32 %v894, %v895
  %v897 = vrot.slane %v896, 2
  %v898 = vadd.f32 %v896, %v897
  %v899 = vrot.slane %v898, 1
  %v900 = vadd.f32 %v898, %v899
  %v901 = vadd.f32 %v749, %v751
  %v902 = vadd.f32 %v901, %v753
  %v903 = vadd.f32 %v902, %v755
  %v904 = vrot.slane %v903, 4
  %v905 = vadd.f32 %v903, %v904
  %v906 = vrot.slane %v905, 2
  %v907 = vadd.f32 %v905, %v906
  %v908 = vrot.slane %v907, 1
  %v909 = vadd.f32 %v907, %v908
  %v910 = vadd.f32 %v756, %v758
  %v911 = vadd.f32 %v910, %v760
  %v912 = vadd.f32 %v911, %v762
  %v913 = vrot.slane %v912, 4
  %v914 = vadd.f32 %v912, %v913
  %v915 = vrot.slane %v914, 2
  %v916 = vadd.f32 %v914, %v915
  %v917 = vrot.slane %v916, 1
  %v918 = vadd.f32 %v916, %v917
  %v919 = vadd.f32 %v757, %v759
  %v920 = vadd.f32 %v919, %v761
  %v921 = vadd.f32 %v920, %v763
  %v922 = vrot.slane %v921, 4
  %v923 = vadd.f32 %v921, %v922
  %v924 = vrot.slane %v923, 2
  %v925 = vadd.f32 %v923, %v924
  %v926 = vrot.slane %v925, 1
  %v927 = vadd.f32 %v925, %v926
  %v928 = vmul.f32 %v900, %v462
  %v929 = vmul.f32 %v909, %v462
  %v930 = vmul.f32 %v918, %v462
  %v931 = vmul.f32 %v927, %v462
  %v932 = vmax.f32 %v748, %v750
  %v933 = vmax.f32 %v932, %v752
  %v934 = vmax.f32 %v933, %v754
  %v935 = vrot.slane %v934, 4
  %v936 = vmax.f32 %v934, %v935
  %v937 = vrot.slane %v936, 2
  %v938 = vmax.f32 %v936, %v937
  %v939 = vrot.slane %v938, 1
  %v940 = vmax.f32 %v938, %v939
  %v941 = vmax.f32 %v749, %v751
  %v942 = vmax.f32 %v941, %v753
  %v943 = vmax.f32 %v942, %v755
  %v944 = vrot.slane %v943, 4
  %v945 = vmax.f32 %v943, %v944
  %v946 = vrot.slane %v945, 2
  %v947 = vmax.f32 %v945, %v946
  %v948 = vrot.slane %v947, 1
  %v949 = vmax.f32 %v947, %v948
  %v950 = vmax.f32 %v756, %v758
  %v951 = vmax.f32 %v950, %v760
  %v952 = vmax.f32 %v951, %v762
  %v953 = vrot.slane %v952, 4
  %v954 = vmax.f32 %v952, %v953
  %v955 = vrot.slane %v954, 2
  %v956 = vmax.f32 %v954, %v955
  %v957 = vrot.slane %v956, 1
  %v958 = vmax.f32 %v956, %v957
  %v959 = vmax.f32 %v757, %v759
  %v960 = vmax.f32 %v959, %v761
  %v961 = vmax.f32 %v960, %v763
  %v962 = vrot.slane %v961, 4
  %v963 = vmax.f32 %v961, %v962
  %v964 = vrot.slane %v963, 2
  %v965 = vmax.f32 %v963, %v964
  %v966 = vrot.slane %v965, 1
  %v967 = vmax.f32 %v965, %v966
  %v972 = vsel %vm140, %v930, %v928
  %v973 = vsel %vm140, %v931, %v929
  %v980 = vsel %vm140, %v958, %v940
  %v981 = vsel %vm140, %v967, %v949
  %984 = vmatpush.msra.mxu0 %v794
  %985 = vmatpush.msra.mxu0 %v792
  %986 = vmatpush.msra.mxu0 %v790
  %987 = vmatpush.msra.mxu0 %v788
  %988 = vmatpush.msra.mxu0 %v786
  %989 = vmatpush.msra.mxu0 %v784
  %990 = vmatpush.msra.mxu0 %v782
  %991 = vmatpush.msra.mxu0 %v780
  %992 = vmatpush.msra.mxu0 %v778
  %993 = vmatpush.msra.mxu0 %v776
  %994 = vmatpush.msra.mxu0 %v774
  %995 = vmatpush.msra.mxu0 %v772
  %996 = vmatpush.msra.mxu0 %v770
  %997 = vmatpush.msra.mxu0 %v768
  %998 = vmatpush.msra.mxu0 %v766
  %999 = vmatpush.msra.mxu0 %v764
  %1000 = vmatmul.f32.gmra.mxu0 %v972
  %v1001 = vpop.f32.mrf.mxu0
  %v1002 = vadd.f32 0.0, %v1001
  %1003 = vdwg.mxu0
  %1004 = vmatpush.msra.mxu0 %v826
  %1005 = vmatpush.msra.mxu0 %v824
  %1006 = vmatpush.msra.mxu0 %v822
  %1007 = vmatpush.msra.mxu0 %v820
  %1008 = vmatpush.msra.mxu0 %v818
  %1009 = vmatpush.msra.mxu0 %v816
  %1010 = vmatpush.msra.mxu0 %v814
  %1011 = vmatpush.msra.mxu0 %v812
  %1012 = vmatpush.msra.mxu0 %v810
  %1013 = vmatpush.msra.mxu0 %v808
  %1014 = vmatpush.msra.mxu0 %v806
  %1015 = vmatpush.msra.mxu0 %v804
  %1016 = vmatpush.msra.mxu0 %v802
  %1017 = vmatpush.msra.mxu0 %v800
  %1018 = vmatpush.msra.mxu0 %v798
  %1019 = vmatpush.msra.mxu0 %v796
  %1020 = vmatmul.f32.gmra.mxu0 %v973
  %v1021 = vpop.f32.mrf.mxu0
  %v1022 = vadd.f32 %v1002, %v1021
  %1023 = vdwg.mxu0
  %1024 = vmatpush.msra.mxu0 %v858
  %1025 = vmatpush.msra.mxu0 %v856
  %1026 = vmatpush.msra.mxu0 %v854
  %1027 = vmatpush.msra.mxu0 %v852
  %1028 = vmatpush.msra.mxu0 %v850
  %1029 = vmatpush.msra.mxu0 %v848
  %1030 = vmatpush.msra.mxu0 %v846
  %1031 = vmatpush.msra.mxu0 %v844
  %1032 = vmatpush.msra.mxu0 %v842
  %1033 = vmatpush.msra.mxu0 %v840
  %1034 = vmatpush.msra.mxu0 %v838
  %1035 = vmatpush.msra.mxu0 %v836
  %1036 = vmatpush.msra.mxu0 %v834
  %1037 = vmatpush.msra.mxu0 %v832
  %1038 = vmatpush.msra.mxu0 %v830
  %1039 = vmatpush.msra.mxu0 %v828
  %1040 = vmatmul.f32.gmra.mxu0 %v980
  %v1041 = vpop.f32.mrf.mxu0
  %v1042 = vadd.f32 %v1022, %v1041
  %1043 = vdwg.mxu0
  %1044 = vmatpush.msra.mxu0 %v890
  %1045 = vmatpush.msra.mxu0 %v888
  %1046 = vmatpush.msra.mxu0 %v886
  %1047 = vmatpush.msra.mxu0 %v884
  %1048 = vmatpush.msra.mxu0 %v882
  %1049 = vmatpush.msra.mxu0 %v880
  %1050 = vmatpush.msra.mxu0 %v878
  %1051 = vmatpush.msra.mxu0 %v876
  %1052 = vmatpush.msra.mxu0 %v874
  %1053 = vmatpush.msra.mxu0 %v872
  %1054 = vmatpush.msra.mxu0 %v870
  %1055 = vmatpush.msra.mxu0 %v868
  %1056 = vmatpush.msra.mxu0 %v866
  %1057 = vmatpush.msra.mxu0 %v864
  %1058 = vmatpush.msra.mxu0 %v862
  %1059 = vmatpush.msra.mxu0 %v860
  %1060 = vmatmul.f32.gmra.mxu0 %v981
  %v1061 = vpop.f32.mrf.mxu0
  %v1062 = vadd.f32 %v1042, %v1061
  %1063 = vdwg.mxu0
  %1064 = vmatpush.msra.mxu0 %v795
  %1065 = vmatpush.msra.mxu0 %v793
  %1066 = vmatpush.msra.mxu0 %v791
  %1067 = vmatpush.msra.mxu0 %v789
  %1068 = vmatpush.msra.mxu0 %v787
  %1069 = vmatpush.msra.mxu0 %v785
  %1070 = vmatpush.msra.mxu0 %v783
  %1071 = vmatpush.msra.mxu0 %v781
  %1072 = vmatpush.msra.mxu0 %v779
  %1073 = vmatpush.msra.mxu0 %v777
  %1074 = vmatpush.msra.mxu0 %v775
  %1075 = vmatpush.msra.mxu0 %v773
  %1076 = vmatpush.msra.mxu0 %v771
  %1077 = vmatpush.msra.mxu0 %v769
  %1078 = vmatpush.msra.mxu0 %v767
  %1079 = vmatpush.msra.mxu0 %v765
  %1080 = vmatmul.f32.gmra.mxu0 %v972
  %v1081 = vpop.f32.mrf.mxu0
  %v1082 = vadd.f32 0.0, %v1081
  %1083 = vdwg.mxu0
  %1084 = vmatpush.msra.mxu0 %v827
  %1085 = vmatpush.msra.mxu0 %v825
  %1086 = vmatpush.msra.mxu0 %v823
  %1087 = vmatpush.msra.mxu0 %v821
  %1088 = vmatpush.msra.mxu0 %v819
  %1089 = vmatpush.msra.mxu0 %v817
  %1090 = vmatpush.msra.mxu0 %v815
  %1091 = vmatpush.msra.mxu0 %v813
  %1092 = vmatpush.msra.mxu0 %v811
  %1093 = vmatpush.msra.mxu0 %v809
  %1094 = vmatpush.msra.mxu0 %v807
  %1095 = vmatpush.msra.mxu0 %v805
  %1096 = vmatpush.msra.mxu0 %v803
  %1097 = vmatpush.msra.mxu0 %v801
  %1098 = vmatpush.msra.mxu0 %v799
  %1099 = vmatpush.msra.mxu0 %v797
  %1100 = vmatmul.f32.gmra.mxu0 %v973
  %v1101 = vpop.f32.mrf.mxu0
  %v1102 = vadd.f32 %v1082, %v1101
  %1103 = vdwg.mxu0
  %1104 = vmatpush.msra.mxu0 %v859
  %1105 = vmatpush.msra.mxu0 %v857
  %1106 = vmatpush.msra.mxu0 %v855
  %1107 = vmatpush.msra.mxu0 %v853
  %1108 = vmatpush.msra.mxu0 %v851
  %1109 = vmatpush.msra.mxu0 %v849
  %1110 = vmatpush.msra.mxu0 %v847
  %1111 = vmatpush.msra.mxu0 %v845
  %1112 = vmatpush.msra.mxu0 %v843
  %1113 = vmatpush.msra.mxu0 %v841
  %1114 = vmatpush.msra.mxu0 %v839
  %1115 = vmatpush.msra.mxu0 %v837
  %1116 = vmatpush.msra.mxu0 %v835
  %1117 = vmatpush.msra.mxu0 %v833
  %1118 = vmatpush.msra.mxu0 %v831
  %1119 = vmatpush.msra.mxu0 %v829
  %1120 = vmatmul.f32.gmra.mxu0 %v980
  %v1121 = vpop.f32.mrf.mxu0
  %v1122 = vadd.f32 %v1102, %v1121
  %1123 = vdwg.mxu0
  %1124 = vmatpush.msra.mxu0 %v891
  %1125 = vmatpush.msra.mxu0 %v889
  %1126 = vmatpush.msra.mxu0 %v887
  %1127 = vmatpush.msra.mxu0 %v885
  %1128 = vmatpush.msra.mxu0 %v883
  %1129 = vmatpush.msra.mxu0 %v881
  %1130 = vmatpush.msra.mxu0 %v879
  %1131 = vmatpush.msra.mxu0 %v877
  %1132 = vmatpush.msra.mxu0 %v875
  %1133 = vmatpush.msra.mxu0 %v873
  %1134 = vmatpush.msra.mxu0 %v871
  %1135 = vmatpush.msra.mxu0 %v869
  %1136 = vmatpush.msra.mxu0 %v867
  %1137 = vmatpush.msra.mxu0 %v865
  %1138 = vmatpush.msra.mxu0 %v863
  %1139 = vmatpush.msra.mxu0 %v861
  %1140 = vmatmul.f32.gmra.mxu0 %v981
  %v1141 = vpop.f32.mrf.mxu0
  %v1142 = vadd.f32 %v1122, %v1141
  %1143 = vdwg.mxu0
  %v1144 = vxor.u32 %v1062, 2147483648
  %v1145 = vxor.u32 %v1142, 2147483648
  %v1146 = vmul.f32 %v1144, 1.442695
  %v1147 = vpow.pop %v1146
  %v1148 = vmul.f32 %v1145, 1.442695
  %v1149 = vpow.pop %v1148
  %v1150 = vadd.f32 %v1147, 1.0
  %v1151 = vadd.f32 %v1149, 1.0
  %v1152 = vrcp.pop %v1150
  %v1153 = vmul.f32 %v1150, %v1152
  %v1154 = vsub.f32 1.0, %v1153
  %v1155 = vmul.f32 %v1152, %v1154
  %v1156 = vadd.f32 %v1152, %v1155
  %vm1157 = vweird.f32 %v1150
  %vm1158 = vweird.f32 %v1152
  %vm1159 = vmor %vm1157, %vm1158
  %v1160 = vsel %vm1159, %v1152, %v1156
  %v1161 = vand.u32 2147483647, %v1150
  %vm1162 = vcmp.eq.f32.partialorder %v1161, 8.507059e+37
  %v1163 = vand.u32 %v1150, 2147483648
  %v1164 = vor.u32 1.1754944e-38, %v1163
  %v1165 = vsel %vm1162, %v1164, %v1160
  %v1166 = vmul.f32 1.0, %v1165
  %v1167 = vrcp.pop %v1151
  %v1168 = vmul.f32 %v1151, %v1167
  %v1169 = vsub.f32 1.0, %v1168
  %v1170 = vmul.f32 %v1167, %v1169
  %v1171 = vadd.f32 %v1167, %v1170
  %vm1172 = vweird.f32 %v1151
  %vm1173 = vweird.f32 %v1167
  %vm1174 = vmor %vm1172, %vm1173
  %v1175 = vsel %vm1174, %v1167, %v1171
  %v1176 = vand.u32 2147483647, %v1151
  %vm1177 = vcmp.eq.f32.partialorder %v1176, 8.507059e+37
  %v1178 = vand.u32 %v1151, 2147483648
  %v1179 = vor.u32 1.1754944e-38, %v1178
  %v1180 = vsel %vm1177, %v1179, %v1175
  %v1181 = vmul.f32 1.0, %v1180
  %v1184 = vrot.slane %v1181, 7
  %v1185 = vsel %vm720, %v1166, %v1184
  %v1186 = vsel %vm140, %v1166, %v1184
  %v1187 = vrot.slane %v1186, 1
  %v1188 = vperm.slane %v1185, 0
  %v1189 = vperm.slane %v1185, 1
  %v1190 = vperm.slane %v1187, 0
  %v1191 = vperm.slane %v1187, 1
  %v1196 = vmul.f32 %v1188, %v748
  %v1197 = vmul.f32 %v1189, %v749
  %v1198 = vmul.f32 %v1188, %v750
  %v1199 = vmul.f32 %v1189, %v751
  %v1200 = vmul.f32 %v1188, %v752
  %v1201 = vmul.f32 %v1189, %v753
  %v1202 = vmul.f32 %v1188, %v754
  %v1203 = vmul.f32 %v1189, %v755
  %v1204 = vmul.f32 %v1190, %v756
  %v1205 = vmul.f32 %v1191, %v757
  %v1206 = vmul.f32 %v1190, %v758
  %v1207 = vmul.f32 %v1191, %v759
  %v1208 = vmul.f32 %v1190, %v760
  %v1209 = vmul.f32 %v1191, %v761
  %v1210 = vmul.f32 %v1190, %v762
  %v1211 = vmul.f32 %v1191, %v763
  %v1212 = vld [vmem:[%s3] sm:$0xff]
  %v1213 = vld [vmem:[%s3 + $0x8] sm:$0xff]
  %v1214 = vld [vmem:[%s3 + $0x10] sm:$0xff]
  %v1215 = vld [vmem:[%s3 + $0x18] sm:$0xff]
  %v1216 = vld [vmem:[%s4] sm:$0xff]
  %v1217 = vadd.f32 %v1196, %v1197
  %1218 = vadd.xlane.f32.xlu0 %v1217
  %v1219 = vpop.xlane.xlu0 %1218
  %v1220 = vadd.f32 %v1198, %v1199
  %1221 = vadd.xlane.f32.xlu0 %v1220
  %v1222 = vpop.xlane.xlu0 %1221
  %v1223 = vadd.f32 %v1200, %v1201
  %1224 = vadd.xlane.f32.xlu0 %v1223
  %v1225 = vpop.xlane.xlu0 %1224
  %v1226 = vadd.f32 %v1202, %v1203
  %1227 = vadd.xlane.f32.xlu0 %v1226
  %v1228 = vpop.xlane.xlu0 %1227
  %v1229 = vadd.f32 %v1204, %v1205
  %1230 = vadd.xlane.f32.xlu0 %v1229
  %v1231 = vpop.xlane.xlu0 %1230
  %v1232 = vadd.f32 %v1206, %v1207
  %1233 = vadd.xlane.f32.xlu0 %v1232
  %v1234 = vpop.xlane.xlu0 %1233
  %v1235 = vadd.f32 %v1208, %v1209
  %1236 = vadd.xlane.f32.xlu0 %v1235
  %v1237 = vpop.xlane.xlu0 %1236
  %v1238 = vadd.f32 %v1210, %v1211
  %1239 = vadd.xlane.f32.xlu0 %v1238
  %v1240 = vpop.xlane.xlu0 %1239
  %v1241 = vmul.f32 %v1219, %v77
  %v1242 = vmul.f32 %v1222, %v77
  %v1243 = vmul.f32 %v1225, %v77
  %v1244 = vmul.f32 %v1228, %v77
  %v1245 = vmul.f32 %v1231, %v77
  %v1246 = vmul.f32 %v1234, %v77
  %v1247 = vmul.f32 %v1237, %v77
  %v1248 = vmul.f32 %v1240, %v77
  %v1249 = vmax.f32 %v1196, %v1197
  %1250 = vmax.xlane.f32.xlu0 %v1249
  %v1251 = vpop.xlane.xlu0 %1250
  %v1252 = vmax.f32 %v1198, %v1199
  %1253 = vmax.xlane.f32.xlu0 %v1252
  %v1254 = vpop.xlane.xlu0 %1253
  %v1255 = vmax.f32 %v1200, %v1201
  %1256 = vmax.xlane.f32.xlu0 %v1255
  %v1257 = vpop.xlane.xlu0 %1256
  %v1258 = vmax.f32 %v1202, %v1203
  %1259 = vmax.xlane.f32.xlu0 %v1258
  %v1260 = vpop.xlane.xlu0 %1259
  %v1261 = vmax.f32 %v1204, %v1205
  %1262 = vmax.xlane.f32.xlu0 %v1261
  %v1263 = vpop.xlane.xlu0 %1262
  %v1264 = vmax.f32 %v1206, %v1207
  %1265 = vmax.xlane.f32.xlu0 %v1264
  %v1266 = vpop.xlane.xlu0 %1265
  %v1267 = vmax.f32 %v1208, %v1209
  %1268 = vmax.xlane.f32.xlu0 %v1267
  %v1269 = vpop.xlane.xlu0 %1268
  %v1270 = vmax.f32 %v1210, %v1211
  %1271 = vmax.xlane.f32.xlu0 %v1270
  %v1272 = vpop.xlane.xlu0 %1271
  %v1281 = vperm.slane %v1241, %v119
  %v1282 = vperm.slane %v1242, %v121
  %v1283 = vsel %vm123, %v1282, %v1281
  %v1284 = vperm.slane %v1243, %v125
  %v1285 = vsel %vm127, %v1284, %v1283
  %v1286 = vperm.slane %v1244, %v129
  %v1287 = vsel %vm131, %v1286, %v1285
  %v1288 = vperm.slane %v1245, %v119
  %v1289 = vperm.slane %v1246, %v121
  %v1290 = vsel %vm123, %v1289, %v1288
  %v1291 = vperm.slane %v1247, %v125
  %v1292 = vsel %vm127, %v1291, %v1290
  %v1293 = vperm.slane %v1248, %v129
  %v1294 = vsel %vm131, %v1293, %v1292
  %v1295 = vsel %vm140, %v1294, %v1287
  %v1305 = vperm.slane %v1251, %v119
  %v1306 = vperm.slane %v1254, %v121
  %v1307 = vsel %vm123, %v1306, %v1305
  %v1308 = vperm.slane %v1257, %v125
  %v1309 = vsel %vm127, %v1308, %v1307
  %v1310 = vperm.slane %v1260, %v129
  %v1311 = vsel %vm131, %v1310, %v1309
  %v1312 = vperm.slane %v1263, %v119
  %v1313 = vperm.slane %v1266, %v121
  %v1314 = vsel %vm123, %v1313, %v1312
  %v1315 = vperm.slane %v1269, %v125
  %v1316 = vsel %vm127, %v1315, %v1314
  %v1317 = vperm.slane %v1272, %v129
  %v1318 = vsel %vm131, %v1317, %v1316
  %v1319 = vsel %vm165, %v1318, %v1311
  %v1321 = vsel %vm168, %v1295, %v1319
  %v1323 = vsel %vm170, %v1321, 0
  %1325 = vmatpush.msra.mxu0 0.0
  %1326 = vmatpush.msra.mxu0 0.0
  %1327 = vmatpush.msra.mxu0 0.0
  %1328 = vmatpush.msra.mxu0 0.0
  %1329 = vmatpush.msra.mxu0 0.0
  %1330 = vmatpush.msra.mxu0 0.0
  %1331 = vmatpush.msra.mxu0 0.0
  %1332 = vmatpush.msra.mxu0 0.0
  %1333 = vmatpush.msra.mxu0 0.0
  %1334 = vmatpush.msra.mxu0 0.0
  %1335 = vmatpush.msra.mxu0 0.0
  %1336 = vmatpush.msra.mxu0 0.0
  %1337 = vmatpush.msra.mxu0 %v1215
  %1338 = vmatpush.msra.mxu0 %v1214
  %1339 = vmatpush.msra.mxu0 %v1213
  %1340 = vmatpush.msra.mxu0 %v1212
  %1341 = vmatmul.f32.gmra.mxu0 %v1323
  %v1342 = vpop.f32.mrf.mxu0
  %v1343 = vadd.f32 0.0, %v1342
  %1344 = vdwg.mxu0
  %v1345 = vmax.f32 %v1343, 0.0
  %v1347 = vsel %vm195, %v1345, 0
  %1349 = vmatpush.msra.mxu0 0.0
  %1350 = vmatpush.msra.mxu0 0.0
  %1351 = vmatpush.msra.mxu0 0.0
  %1352 = vmatpush.msra.mxu0 0.0
  %1353 = vmatpush.msra.mxu0 0.0
  %1354 = vmatpush.msra.mxu0 0.0
  %1355 = vmatpush.msra.mxu0 0.0
  %1356 = vmatpush.msra.mxu0 0.0
  %1357 = vmatpush.msra.mxu0 0.0
  %1358 = vmatpush.msra.mxu0 0.0
  %1359 = vmatpush.msra.mxu0 0.0
  %1360 = vmatpush.msra.mxu0 0.0
  %1361 = vmatpush.msra.mxu0 0.0
  %1362 = vmatpush.msra.mxu0 0.0
  %1363 = vmatpush.msra.mxu0 0.0
  %1364 = vmatpush.msra.mxu0 %v1216
  %1365 = vmatmul.f32.gmra.mxu0 %v1347
  %v1366 = vpop.f32.mrf.mxu0
  %v1367 = vadd.f32 0.0, %v1366
  %1368 = vdwg.mxu0
  %v1370 = vrot.slane %v1367, 2
  %v1372 = vadd.f32 %v1367, %v1370
  %v1373 = vxor.u32 %v1372, 2147483648
  %v1374 = vmul.f32 %v1373, 1.442695
  %v1375 = vpow.pop %v1374
  %v1376 = vadd.f32 %v1375, 1.0
  %v1377 = vrcp.pop %v1376
  %v1378 = vmul.f32 %v1376, %v1377
  %v1379 = vsub.f32 1.0, %v1378
  %v1380 = vmul.f32 %v1377, %v1379
  %v1381 = vadd.f32 %v1377, %v1380
  %vm1382 = vweird.f32 %v1376
  %vm1383 = vweird.f32 %v1377
  %vm1384 = vmor %vm1382, %vm1383
  %v1385 = vsel %vm1384, %v1377, %v1381
  %v1386 = vand.u32 2147483647, %v1376
  %vm1387 = vcmp.eq.f32.partialorder %v1386, 8.507059e+37
  %v1388 = vand.u32 %v1376, 2147483648
  %v1389 = vor.u32 1.1754944e-38, %v1388
  %v1390 = vsel %vm1387, %v1389, %v1385
  %v1391 = vmul.f32 1.0, %v1390
  %v1392 = vperm.slane %v1391, 0
  %v1393 = vlaneseq
  %v1394 = vshrl.u32 %v1393, 7
  %1396 = vset.pattern.permute.xlu0 %v1394
  %1397 = vperm.xlu0 %1396, %v1392
  %v1398 = vpop.permute.xlu0 %1397
  %v1399 = vlaneseq
  %v1400 = vshrl.u32 %v1399, 7
  %v1401 = vadd.s32 %v1400, 8
  %1402 = vset.pattern.permute.xlu0 %v1401
  %1403 = vperm.xlu0 %1402, %v1392
  %v1404 = vpop.permute.xlu0 %1403
  %v1405 = vlaneseq
  %v1406 = vshrl.u32 %v1405, 7
  %v1407 = vadd.s32 %v1406, 16
  %1408 = vset.pattern.permute.xlu0 %v1407
  %1409 = vperm.xlu0 %1408, %v1392
  %v1410 = vpop.permute.xlu0 %1409
  %v1411 = vlaneseq
  %v1412 = vshrl.u32 %v1411, 7
  %v1413 = vadd.s32 %v1412, 24
  %1414 = vset.pattern.permute.xlu0 %v1413
  %1415 = vperm.xlu0 %1414, %v1392
  %v1416 = vpop.permute.xlu0 %1415
  %v1417 = vperm.slane %v1391, 1
  %v1418 = vlaneseq
  %v1419 = vshrl.u32 %v1418, 7
  %1421 = vset.pattern.permute.xlu0 %v1419
  %1422 = vperm.xlu0 %1421, %v1417
  %v1423 = vpop.permute.xlu0 %1422
  %v1424 = vlaneseq
  %v1425 = vshrl.u32 %v1424, 7
  %v1426 = vadd.s32 %v1425, 8
  %1427 = vset.pattern.permute.xlu0 %v1426
  %1428 = vperm.xlu0 %1427, %v1417
  %v1429 = vpop.permute.xlu0 %1428
  %v1430 = vlaneseq
  %v1431 = vshrl.u32 %v1430, 7
  %v1432 = vadd.s32 %v1431, 16
  %1433 = vset.pattern.permute.xlu0 %v1432
  %1434 = vperm.xlu0 %1433, %v1417
  %v1435 = vpop.permute.xlu0 %1434
  %v1436 = vlaneseq
  %v1437 = vshrl.u32 %v1436, 7
  %v1438 = vadd.s32 %v1437, 24
  %1439 = vset.pattern.permute.xlu0 %v1438
  %1440 = vperm.xlu0 %1439, %v1417
  %v1441 = vpop.permute.xlu0 %1440
  %v1442 = vmul.f32 %v1398, %v1196
  %v1443 = vmul.f32 %v1398, %v1197
  %v1444 = vmul.f32 %v1404, %v1198
  %v1445 = vmul.f32 %v1404, %v1199
  %v1446 = vmul.f32 %v1410, %v1200
  %v1447 = vmul.f32 %v1410, %v1201
  %v1448 = vmul.f32 %v1416, %v1202
  %v1449 = vmul.f32 %v1416, %v1203
  %v1450 = vmul.f32 %v1423, %v1204
  %v1451 = vmul.f32 %v1423, %v1205
  %v1452 = vmul.f32 %v1429, %v1206
  %v1453 = vmul.f32 %v1429, %v1207
  %v1454 = vmul.f32 %v1435, %v1208
  %v1455 = vmul.f32 %v1435, %v1209
  %v1456 = vmul.f32 %v1441, %v1210
  %v1457 = vmul.f32 %v1441, %v1211
  %1458 = vst [vmem:[%s7] sm:$0xff] %v1442
  %1459 = vst [vmem:[%s7 + $0x8] sm:$0xff] %v1443
  %1460 = vst [vmem:[%s7 + $0x10] sm:$0xff] %v1444
  %1461 = vst [vmem:[%s7 + $0x18] sm:$0xff] %v1445
  %1462 = vst [vmem:[%s7 + $0x20] sm:$0xff] %v1446
  %1463 = vst [vmem:[%s7 + $0x28] sm:$0xff] %v1447
  %1464 = vst [vmem:[%s7 + $0x30] sm:$0xff] %v1448
  %1465 = vst [vmem:[%s7 + $0x38] sm:$0xff] %v1449
  %1466 = vst [vmem:[%s7 + $0x40] sm:$0xff] %v1450
  %1467 = vst [vmem:[%s7 + $0x48] sm:$0xff] %v1451
  %1468 = vst [vmem:[%s7 + $0x50] sm:$0xff] %v1452
  %1469 = vst [vmem:[%s7 + $0x58] sm:$0xff] %v1453
  %1470 = vst [vmem:[%s7 + $0x60] sm:$0xff] %v1454
  %1471 = vst [vmem:[%s7 + $0x68] sm:$0xff] %v1455
  %1472 = vst [vmem:[%s7 + $0x70] sm:$0xff] %v1456
  %1473 = vst [vmem:[%s7 + $0x78] sm:$0xff] %v1457
  // Predicated region
  $region30: #{dcbam_forward.1} parent=0 // pred_check
    _
  $region31: #{dcbam_forward.1} parent=0 // pred_check_branch
    %1475 = sbr.rel (0) target = $region33
  $region32: #{dcbam_forward.1} parent=0 // pred_region
    _
  $region33: #{dcbam_forward.1} parent=0 // pred_fallthru
    _
  // Predicated region
  $region34: #{dcbam_forward.1} parent=0 // pred_check
    _
  $region35: #{dcbam_forward.1} parent=0 // pred_check_branch
    %1477 = sbr.rel (0) target = $region37
  $region36: #{dcbam_forward.1} parent=0 // pred_region
    _
  $region37: #{dcbam_forward.1} parent=0 // pred_fallthru
    _

</llo_original>
